<compile_context>
chip_gen: v5e
topology: v5e:2x2
jax: 0.10.0
libtpu: 0.0.40
codegen_flags: <defaults>
</compile_context>

<pallas_src>
import math

import jax
import jax.numpy as jnp
from jax.experimental import pallas as pl
from jax.experimental.pallas import tpu as pltpu

INPUT_SHAPE = 256 * 3        # 768
H1, H2, H3, OUT = 256, 128, 64, 1
H3P, OUTP = 128, 128         # lane-dense padded widths for layers 3/4


def _round_up(x, m):
    return ((x + m - 1) // m) * m


def _pick_block_b(B):
    """Batch tile: multiple of 128 (lane-dense transposed output store), large
    enough to sit near the HBM-roofline knee, small enough to keep >=2 grid
    steps (v7x megacore / DMA-compute overlap) and to bound ragged-batch
    padding.  Costs are rough ns estimates; relative order is what matters."""
    cap = 1024 if B >= 4096 else 512
    best_blk, best_cost = 128, None
    for blk in range(128, cap + 128, 128):
        bp = _round_up(B, blk)
        grid = bp // blk
        cost = bp * 2.0 + grid * 350.0        # HBM per row + per-grid-step overhead
        if grid < 2:
            cost *= 1.8                       # single step: one core, no overlap
        if bp > B:
            cost += (B + bp) * 2.0            # wrapper pad copy (read B, write bp)
        if best_cost is None or cost < best_cost:
            best_blk, best_cost = blk, cost
    return best_blk


def _mlp_kernel(x_ref, w1_ref, b1_ref, w2_ref, b2_ref, w3_ref, b3_ref,
                w4_ref, b4_ref, o_ref):
    # Fused 4-layer MLP.  Matmuls hit the MXU with f32 accumulation (operands
    # already in the weights' dtype — bf16 on the fast path); tanh rides the
    # EUP; bias adds stay f32 on the VPU.
    w_dt = w1_ref.dtype
    x = x_ref[...].astype(w_dt)          # no-op: wrapper delivers x in w_dt
    h = jnp.dot(x, w1_ref[...], preferred_element_type=jnp.float32) + b1_ref[...]
    h = jnp.tanh(h)
    h = jnp.dot(h.astype(w_dt), w2_ref[...],
                preferred_element_type=jnp.float32) + b2_ref[...]
    h = jnp.tanh(h)
    h = jnp.dot(h.astype(w_dt), w3_ref[...],
                preferred_element_type=jnp.float32) + b3_ref[...]
    h = jnp.tanh(h)
    y = jnp.dot(h.astype(w_dt), w4_ref[...],
                preferred_element_type=jnp.float32) + b4_ref[...]
    # (block_b, 128) -> transpose on the XLU (free slot) -> keep the single
    # real output row -> lane-dense (1, block_b) store.  Avoids writing a
    # 128x-padded output block to HBM.
    o_ref[...] = jnp.transpose(y)[0:1, :].astype(o_ref.dtype)


def prepare_params(params, *, use_bf16=True):
    """One-time parameter prep (hoisted out of the hot path): pad the tail
    layers to lane-dense widths and cast weights to the MXU operand dtype."""
    w1, b1, w2, b2, w3, b3, w4, b4 = params
    w_dt = jnp.bfloat16 if use_bf16 else jnp.float32
    w3p = jnp.pad(w3, ((0, 0), (0, H3P - H3)))
    b3p = jnp.pad(b3, ((0, 0), (0, H3P - H3)))
    w4p = jnp.pad(w4, ((0, H3P - H3), (0, OUTP - OUT)))
    b4p = jnp.pad(b4, ((0, 0), (0, OUTP - OUT)))
    return (w1.astype(w_dt), b1.astype(jnp.float32),
            w2.astype(w_dt), b2.astype(jnp.float32),
            w3p.astype(w_dt), b3p.astype(jnp.float32),
            w4p.astype(w_dt), b4p.astype(jnp.float32))


def mlp_regressor(x, prepared_params, *, block_b=None):
    """Run the fused MLP kernel.

    x: (B, INPUT_SHAPE); pass bf16 for the fast path (halves the dominant
    HBM read) or f32 (cast fuses into the input DMA when jitted).
    prepared_params: output of prepare_params().  Returns (B, 1) float32."""
    B, F = x.shape
    assert F == INPUT_SHAPE
    w1, b1, w2, b2, w3, b3, w4, b4 = prepared_params
    w_dt = w1.dtype

    # Input dtype: run the dominant HBM read in the MXU operand dtype.
    if x.dtype != w_dt:
        x = x.astype(w_dt)        # fused into the pallas_call via allow_input_fusion

    # ---- batch tiling: multiple-of-128 tile, pad ragged batches with zeros ----
    if block_b is None:
        block_b = _pick_block_b(B)
    block_b = max(128, _round_up(block_b, 128))
    Bp = _round_up(B, block_b)
    if Bp != B:
        x = jnp.pad(x, ((0, Bp - B), (0, 0)))
    grid = (Bp // block_b,)

    # ---- VMEM budget / cost estimate ----
    itemsize = jnp.dtype(w_dt).itemsize
    weight_bytes = (F * H1 + H1 * H2 + H2 * H3P + H3P * OUTP) * itemsize
    bias_bytes = (H1 + H2 + H3P + OUTP) * 4
    io_tile_bytes = 2 * block_b * F * itemsize + 2 * block_b * 4  # dbl-buffered x / out
    vmem_limit = int(min(32 << 20,
                         max(16 << 20,
                             2 * (weight_bytes + bias_bytes)
                             + io_tile_bytes + (8 << 20))))

    cost = pl.CostEstimate(
        flops=2 * Bp * (F * H1 + H1 * H2 + H2 * H3P + H3P * OUTP),
        transcendentals=Bp * (H1 + H2 + H3P),
        bytes_accessed=Bp * F * itemsize + Bp * 4 + weight_bytes + bias_bytes,
    )

    rep = lambda i: (0, 0)   # weights/biases replicated across the batch grid

    out = pl.pallas_call(
        _mlp_kernel,
        out_shape=jax.ShapeDtypeStruct((1, Bp), jnp.float32),
        grid_spec=pltpu.PrefetchScalarGridSpec(
            num_scalar_prefetch=0,
            grid=grid,
            in_specs=[
                pl.BlockSpec((block_b, F), lambda i: (i, 0)),   # x tile
                pl.BlockSpec((F, H1), rep),
                pl.BlockSpec((1, H1), rep),
                pl.BlockSpec((H1, H2), rep),
                pl.BlockSpec((1, H2), rep),
                pl.BlockSpec((H2, H3P), rep),
                pl.BlockSpec((1, H3P), rep),
                pl.BlockSpec((H3P, OUTP), rep),
                pl.BlockSpec((1, OUTP), rep),
            ],
            out_specs=pl.BlockSpec((1, block_b), lambda i: (0, i)),
        ),
        compiler_params=pltpu.CompilerParams(
            dimension_semantics=("parallel",),
            vmem_limit_bytes=vmem_limit,
            allow_input_fusion=[True] + [False] * 8),
        cost_estimate=cost,
    )(x, w1, b1, w2, b2, w3, b3, w4, b4)

    return out[0, :B].reshape(B, OUT)


def init_params(key):
    """Deterministic init matching nn.Linear's default U(-1/sqrt(fan_in), ...).

    Weights stored as (in_features, out_features) for x @ W."""
    dims = [(INPUT_SHAPE, H1), (H1, H2), (H2, H3), (H3, OUT)]
    params = []
    for d_in, d_out in dims:
        key, kw, kb = jax.random.split(key, 3)
        bound = 1.0 / math.sqrt(d_in)
        w = jax.random.uniform(kw, (d_in, d_out), jnp.float32, -bound, bound)
        b = jax.random.uniform(kb, (1, d_out), jnp.float32, -bound, bound)
        params += [w, b]
    return tuple(params)


def mlp_reference(x, params):
    w1, b1, w2, b2, w3, b3, w4, b4 = params
    h = jnp.tanh(x @ w1 + b1)
    h = jnp.tanh(h @ w2 + b2)
    h = jnp.tanh(h @ w3 + b3)
    return h @ w4 + b4


if __name__ == "__main__":
    key = jax.random.PRNGKey(0)
    key, kx, kx2 = jax.random.split(key, 3)
    params = init_params(key)

    # Case 1: tiny inference batch (grid=1, latency path), full-f32 kernel,
    # tight tolerance.
    B = 8
    x = jax.random.normal(kx, (B, INPUT_SHAPE), jnp.float32)
    params_f32 = prepare_params(params, use_bf16=False)
    y = jax.block_until_ready(mlp_regressor(x, params_f32))
    y_ref = mlp_reference(x, params)
    assert y.shape == (B, 1)
    assert jnp.allclose(y, y_ref, atol=1e-4, rtol=1e-4), (
        f"f32 max abs err {jnp.max(jnp.abs(y - y_ref))}")

    # Case 2: multi-tile batch, bf16 input at the API boundary (no pad, grid>1,
    # bf16 MXU path).  Looser tolerance covers the deliberate bf16-operand
    # precision trade.
    B2 = 384
    x2 = jax.random.normal(kx2, (B2, INPUT_SHAPE), jnp.float32)
    params_bf16 = prepare_params(params, use_bf16=True)
    y2 = jax.block_until_ready(
        mlp_regressor(x2.astype(jnp.bfloat16), params_bf16, block_b=128))
    y2_ref = mlp_reference(x2, params)
    assert y2.shape == (B2, 1)
    assert jnp.allclose(y2, y2_ref, atol=3e-2, rtol=3e-2), (
        f"bf16 max abs err {jnp.max(jnp.abs(y2 - y2_ref))}")

    print("KERNEL_OK")
</pallas_src>

<mosaic_0001>
module attributes {stable_mosaic.version = 11 : i64} {
  func.func @_mlp_kernel(%arg0: i32, %arg1: memref<128x768xf32, #tpu.memory_space<vmem>>, %arg2: memref<768x256xf32, #tpu.memory_space<vmem>>, %arg3: memref<1x256xf32, #tpu.memory_space<vmem>>, %arg4: memref<256x128xf32, #tpu.memory_space<vmem>>, %arg5: memref<1x128xf32, #tpu.memory_space<vmem>>, %arg6: memref<128x128xf32, #tpu.memory_space<vmem>>, %arg7: memref<1x128xf32, #tpu.memory_space<vmem>>, %arg8: memref<128x128xf32, #tpu.memory_space<vmem>>, %arg9: memref<1x128xf32, #tpu.memory_space<vmem>>, %arg10: memref<1x128xf32, #tpu.memory_space<vmem>>) attributes {dimension_semantics = [#tpu.dimension_semantics<parallel>], iteration_bounds = array<i64: 1>, scalar_prefetch = 0 : i64, scratch_operands = 0 : i64, tpu.core_type = #tpu.core_type<tc>, window_params = [{transform_indices = @transform_0, window_bounds = array<i64: 128, 768>}, {pipeline_mode = #tpu.pipeline_mode<synchronous>, transform_indices = @transform_1, window_bounds = array<i64: 768, 256>}, {pipeline_mode = #tpu.pipeline_mode<synchronous>, transform_indices = @transform_2, window_bounds = array<i64: 1, 256>}, {pipeline_mode = #tpu.pipeline_mode<synchronous>, transform_indices = @transform_3, window_bounds = array<i64: 256, 128>}, {pipeline_mode = #tpu.pipeline_mode<synchronous>, transform_indices = @transform_4, window_bounds = array<i64: 1, 128>}, {pipeline_mode = #tpu.pipeline_mode<synchronous>, transform_indices = @transform_5, window_bounds = array<i64: 128, 128>}, {pipeline_mode = #tpu.pipeline_mode<synchronous>, transform_indices = @transform_6, window_bounds = array<i64: 1, 128>}, {pipeline_mode = #tpu.pipeline_mode<synchronous>, transform_indices = @transform_7, window_bounds = array<i64: 128, 128>}, {pipeline_mode = #tpu.pipeline_mode<synchronous>, transform_indices = @transform_8, window_bounds = array<i64: 1, 128>}, {transform_indices = @transform_9, window_bounds = array<i64: 1, 128>}]} {
    %c0 = arith.constant 0 : index
    %c0_0 = arith.constant 0 : index
    %0 = vector.load %arg1[%c0, %c0_0] : memref<128x768xf32, #tpu.memory_space<vmem>>, vector<128x768xf32>
    %c0_1 = arith.constant 0 : index
    %c0_2 = arith.constant 0 : index
    %1 = vector.load %arg2[%c0_1, %c0_2] : memref<768x256xf32, #tpu.memory_space<vmem>>, vector<768x256xf32>
    %cst = arith.constant dense<0.000000e+00> : vector<128x256xf32>
    %2 = tpu.matmul %0, %1, %cst {dimension_numbers = #tpu.dot_dimension_numbers<[1], [0], [0], [1], [0, 0, 1, 1], [], []>} : vector<128x768xf32>, vector<768x256xf32>, vector<128x256xf32> -> vector<128x256xf32>
    %c0_3 = arith.constant 0 : index
    %c0_4 = arith.constant 0 : index
    %3 = vector.load %arg3[%c0_3, %c0_4] : memref<1x256xf32, #tpu.memory_space<vmem>>, vector<1x256xf32>
    %4 = vector.broadcast %3 : vector<1x256xf32> to vector<128x256xf32>
    %5 = arith.addf %2, %4 : vector<128x256xf32>
    %6 = math.tanh %5 : vector<128x256xf32>
    %c0_5 = arith.constant 0 : index
    %c0_6 = arith.constant 0 : index
    %7 = vector.load %arg4[%c0_5, %c0_6] : memref<256x128xf32, #tpu.memory_space<vmem>>, vector<256x128xf32>
    %cst_7 = arith.constant dense<0.000000e+00> : vector<128x128xf32>
    %8 = tpu.matmul %6, %7, %cst_7 {dimension_numbers = #tpu.dot_dimension_numbers<[1], [0], [0], [1], [0, 0, 1, 1], [], []>} : vector<128x256xf32>, vector<256x128xf32>, vector<128x128xf32> -> vector<128x128xf32>
    %c0_8 = arith.constant 0 : index
    %c0_9 = arith.constant 0 : index
    %9 = vector.load %arg5[%c0_8, %c0_9] : memref<1x128xf32, #tpu.memory_space<vmem>>, vector<1x128xf32>
    %10 = vector.broadcast %9 : vector<1x128xf32> to vector<128x128xf32>
    %11 = arith.addf %8, %10 : vector<128x128xf32>
    %12 = math.tanh %11 : vector<128x128xf32>
    %c0_10 = arith.constant 0 : index
    %c0_11 = arith.constant 0 : index
    %13 = vector.load %arg6[%c0_10, %c0_11] : memref<128x128xf32, #tpu.memory_space<vmem>>, vector<128x128xf32>
    %cst_12 = arith.constant dense<0.000000e+00> : vector<128x128xf32>
    %14 = tpu.matmul %12, %13, %cst_12 {dimension_numbers = #tpu.dot_dimension_numbers<[1], [0], [0], [1], [0, 0, 1, 1], [], []>} : vector<128x128xf32>, vector<128x128xf32>, vector<128x128xf32> -> vector<128x128xf32>
    %c0_13 = arith.constant 0 : index
    %c0_14 = arith.constant 0 : index
    %15 = vector.load %arg7[%c0_13, %c0_14] : memref<1x128xf32, #tpu.memory_space<vmem>>, vector<1x128xf32>
    %16 = vector.broadcast %15 : vector<1x128xf32> to vector<128x128xf32>
    %17 = arith.addf %14, %16 : vector<128x128xf32>
    %18 = math.tanh %17 : vector<128x128xf32>
    %c0_15 = arith.constant 0 : index
    %c0_16 = arith.constant 0 : index
    %19 = vector.load %arg8[%c0_15, %c0_16] : memref<128x128xf32, #tpu.memory_space<vmem>>, vector<128x128xf32>
    %cst_17 = arith.constant dense<0.000000e+00> : vector<128x128xf32>
    %20 = tpu.matmul %18, %19, %cst_17 {dimension_numbers = #tpu.dot_dimension_numbers<[1], [0], [0], [1], [0, 0, 1, 1], [], []>} : vector<128x128xf32>, vector<128x128xf32>, vector<128x128xf32> -> vector<128x128xf32>
    %c0_18 = arith.constant 0 : index
    %c0_19 = arith.constant 0 : index
    %21 = vector.load %arg9[%c0_18, %c0_19] : memref<1x128xf32, #tpu.memory_space<vmem>>, vector<1x128xf32>
    %22 = vector.broadcast %21 : vector<1x128xf32> to vector<128x128xf32>
    %23 = arith.addf %20, %22 : vector<128x128xf32>
    %24 = tpu.transpose %23, [1, 0] : vector<128x128xf32> -> vector<128x128xf32>
    %25 = vector.extract_strided_slice %24 {offsets = [0, 0], sizes = [1, 128], strides = [1, 1]} : vector<128x128xf32> to vector<1x128xf32>
    %c0_20 = arith.constant 0 : index
    %c0_21 = arith.constant 0 : index
    %26 = vector.load %arg10[%c0_20, %c0_21] : memref<1x128xf32, #tpu.memory_space<vmem>>, vector<1x128xf32>
    tpu.vector_store %arg10[%c0_20, %c0_21], %25 {strides = array<i32>} : memref<1x128xf32, #tpu.memory_space<vmem>>, vector<1x128xf32>,
    return
  }
  func.func @transform_0(%arg0: i32) -> (i32, i32) {
    %c0_i32 = arith.constant 0 : i32
    %c0_i32_0 = arith.constant 0 : i32
    return %arg0, %c0_i32 : i32, i32
  }
  func.func @transform_1(%arg0: i32) -> (i32, i32) {
    %c0_i32 = arith.constant 0 : i32
    %c0_i32_0 = arith.constant 0 : i32
    %c0_i32_1 = arith.constant 0 : i32
    return %c0_i32, %c0_i32_0 : i32, i32
  }
  func.func @transform_2(%arg0: i32) -> (i32, i32) {
    %c0_i32 = arith.constant 0 : i32
    %c0_i32_0 = arith.constant 0 : i32
    %c0_i32_1 = arith.constant 0 : i32
    return %c0_i32, %c0_i32_0 : i32, i32
  }
  func.func @transform_3(%arg0: i32) -> (i32, i32) {
    %c0_i32 = arith.constant 0 : i32
    %c0_i32_0 = arith.constant 0 : i32
    %c0_i32_1 = arith.constant 0 : i32
    return %c0_i32, %c0_i32_0 : i32, i32
  }
  func.func @transform_4(%arg0: i32) -> (i32, i32) {
    %c0_i32 = arith.constant 0 : i32
    %c0_i32_0 = arith.constant 0 : i32
    %c0_i32_1 = arith.constant 0 : i32
    return %c0_i32, %c0_i32_0 : i32, i32
  }
  func.func @transform_5(%arg0: i32) -> (i32, i32) {
    %c0_i32 = arith.constant 0 : i32
    %c0_i32_0 = arith.constant 0 : i32
    %c0_i32_1 = arith.constant 0 : i32
    return %c0_i32, %c0_i32_0 : i32, i32
  }
  func.func @transform_6(%arg0: i32) -> (i32, i32) {
    %c0_i32 = arith.constant 0 : i32
    %c0_i32_0 = arith.constant 0 : i32
    %c0_i32_1 = arith.constant 0 : i32
    return %c0_i32, %c0_i32_0 : i32, i32
  }
  func.func @transform_7(%arg0: i32) -> (i32, i32) {
    %c0_i32 = arith.constant 0 : i32
    %c0_i32_0 = arith.constant 0 : i32
    %c0_i32_1 = arith.constant 0 : i32
    return %c0_i32, %c0_i32_0 : i32, i32
  }
  func.func @transform_8(%arg0: i32) -> (i32, i32) {
    %c0_i32 = arith.constant 0 : i32
    %c0_i32_0 = arith.constant 0 : i32
    %c0_i32_1 = arith.constant 0 : i32
    return %c0_i32, %c0_i32_0 : i32, i32
  }
  func.func @transform_9(%arg0: i32) -> (i32, i32) {
    %c0_i32 = arith.constant 0 : i32
    %c0_i32_0 = arith.constant 0 : i32
    return %c0_i32, %arg0 : i32, i32
  }
}

</mosaic_0001>

<llo_original>
// kernel: tpu_custom_call.1
$region0: #{tpu_custom_call.1}
  #allocation0 [shape = 'u32[]', space=smem, size = 0x4, offset = 0x4, fixed_abs, tag = 'smem constant byte address 0x4 - core index']
  #allocation1 [shape = 'u32[72,128]{1,0:T(1,128)}', space=vmem, size = 0x9000, scoped, tag = 'internal scratch']
  %s0 = inlined_call_operand.hbm [shape: f32[128,768], index: 0, kind: input, shape index: {}]
  %s1 = inlined_call_operand.hbm [shape: f32[768,256], index: 1, kind: input, shape index: {}]
  %s2 = inlined_call_operand.hbm [shape: f32[1,256], index: 2, kind: input, shape index: {}]
  %s3 = inlined_call_operand.hbm [shape: f32[256,128], index: 3, kind: input, shape index: {}]
  %s4 = inlined_call_operand.vmem [shape: f32[1,128], index: 4, kind: input, shape index: {}]
  %s5 = inlined_call_operand.hbm [shape: f32[128,128], index: 5, kind: input, shape index: {}]
  %s6 = inlined_call_operand.vmem [shape: f32[1,128], index: 6, kind: input, shape index: {}]
  %s7 = inlined_call_operand.hbm [shape: f32[128,128], index: 7, kind: input, shape index: {}]
  %s8 = inlined_call_operand.vmem [shape: f32[1,128], index: 8, kind: input, shape index: {}]
  %s9 = inlined_call_operand.hbm [shape: f32[1,128], index: 9, kind: output, shape index: {}]
  %s10 = sld [smem:[#allocation0]]
  $region70: #{tpu_custom_call.1} parent=0
    _
  %s12 = ssub.s32 1, %s10
  %s13 = scalar_select 0, %s12, %s10
  $region1: #{tpu_custom_call.1} parent=0
    #allocation2 [shape = 'u8[393216]{0}', space=vmem, size = 0x60000, scoped, tag = 'input window, operand 0, single buffered']
    #allocation3 [shape = 's32[1]{0}', space=sflag, size = 0x4, scoped, tag = 'scoped memory for tpu_custom_call.1']
    #allocation4 [shape = 's32[1]{0}', space=sflag, size = 0x4, scoped, tag = 'scoped memory for tpu_custom_call.1']
    #allocation5 [shape = 'u8[786432]{0}', space=vmem, size = 0xc0000, scoped, tag = 'input window, operand 1, single buffered']
    #allocation6 [shape = 's32[1]{0}', space=sflag, size = 0x4, scoped, tag = 'scoped memory for tpu_custom_call.1']
    #allocation7 [shape = 'u8[1024]{0}', space=vmem, size = 0x400, scoped, tag = 'input window, operand 2, single buffered']
    #allocation8 [shape = 'u8[131072]{0}', space=vmem, size = 0x20000, scoped, tag = 'input window, operand 3, single buffered']
    #allocation9 [shape = 's32[1]{0}', space=sflag, size = 0x4, scoped, tag = 'scoped memory for tpu_custom_call.1']
    #allocation10 [shape = 'u8[65536]{0}', space=vmem, size = 0x10000, scoped, tag = 'input window, operand 5, single buffered']
    #allocation11 [shape = 'u8[65536]{0}', space=vmem, size = 0x10000, scoped, tag = 'input window, operand 7, single buffered']
    #allocation12 [shape = 's32[1]{0}', space=sflag, size = 0x4, scoped, tag = 'scoped memory for tpu_custom_call.1']
    #allocation13 [shape = 'u8[512]{0}', space=vmem, size = 0x400, scoped, tag = 'output window, operand 0, single buffered']
    %14 = vsyncpa [#allocation3], 0
    %15 = vsyncpa [#allocation6], 0
    %16 = vsyncpa [#allocation9], 0
    %17 = vsyncpa [#allocation12], 0
    %18 = vsyncpa [#allocation4], 0
    // Predicated region
    $region2: #{tpu_custom_call.1} parent=1 // pred_check
      _
    $region3: #{tpu_custom_call.1} parent=1 // pred_check_branch
      %20 = sbr.rel (0) target = $region5
    $region4: #{tpu_custom_call.1} parent=1 // pred_region
      %22 = vsyncadd [#allocation3], 0
      %s23 = sshll.u32 %s0, 4
      %s24 = int_to_ptr.hbm [resolvable:$true] %s23
      %s25 = sshll.u32 [#allocation2], 4
      %s26 = int_to_ptr.vmem [resolvable:$true] %s25
      %31 = dma.hbm_to_vmem [thread:$0]  %s24, 12288, %s26, [#allocation3], 768, 768, 48
    $region5: #{tpu_custom_call.1} parent=1 // pred_fallthru
      _
    // Predicated region
    $region6: #{tpu_custom_call.1} parent=1 // pred_check
      _
    $region7: #{tpu_custom_call.1} parent=1 // pred_check_branch
      %33 = sbr.rel (0) target = $region9
    $region8: #{tpu_custom_call.1} parent=1 // pred_region
      %35 = vsyncadd [#allocation6], 0
      %s36 = sshll.u32 %s1, 4
      %s37 = int_to_ptr.hbm [resolvable:$true] %s36
      %s38 = sshll.u32 [#allocation5], 4
      %s39 = int_to_ptr.vmem [resolvable:$true] %s38
      %44 = dma.hbm_to_vmem [thread:$0]  %s37, 24576, %s39, [#allocation6], 256, 256, 16
    $region9: #{tpu_custom_call.1} parent=1 // pred_fallthru
      _
    // Predicated region
    $region10: #{tpu_custom_call.1} parent=1 // pred_check
      _
    $region11: #{tpu_custom_call.1} parent=1 // pred_check_branch
      %46 = sbr.rel (0) target = $region13
    $region12: #{tpu_custom_call.1} parent=1 // pred_region
      %48 = vsyncadd [#allocation6], 0
      %s50 = sshll.u32 %s2, 4
      %s51 = int_to_ptr.hbm [resolvable:$true] %s50
      %s52 = sshll.u32 [#allocation7], 4
      %s53 = int_to_ptr.vmem [resolvable:$true] %s52
      %55 = dma.hbm_to_vmem [thread:$0]  %s51, 32, %s53, [#allocation6]
    $region13: #{tpu_custom_call.1} parent=1 // pred_fallthru
      _
    // Predicated region
    $region14: #{tpu_custom_call.1} parent=1 // pred_check
      _
    $region15: #{tpu_custom_call.1} parent=1 // pred_check_branch
      %57 = sbr.rel (0) target = $region17
    $region16: #{tpu_custom_call.1} parent=1 // pred_region
      %59 = vsyncadd [#allocation9], 0
      %s60 = sshll.u32 %s3, 4
      %s61 = int_to_ptr.hbm [resolvable:$true] %s60
      %s62 = sshll.u32 [#allocation8], 4
      %s63 = int_to_ptr.vmem [resolvable:$true] %s62
      %68 = dma.hbm_to_vmem [thread:$0]  %s61, 4096, %s63, [#allocation9], 128, 128, 8
    $region17: #{tpu_custom_call.1} parent=1 // pred_fallthru
      _
    // Predicated region
    $region18: #{tpu_custom_call.1} parent=1 // pred_check
      _
    $region19: #{tpu_custom_call.1} parent=1 // pred_check_branch
      %70 = sbr.rel (0) target = $region21
    $region20: #{tpu_custom_call.1} parent=1 // pred_region
      _
    $region21: #{tpu_custom_call.1} parent=1 // pred_fallthru
      _
    // Predicated region
    $region22: #{tpu_custom_call.1} parent=1 // pred_check
      _
    $region23: #{tpu_custom_call.1} parent=1 // pred_check_branch
      %72 = sbr.rel (0) target = $region25
    $region24: #{tpu_custom_call.1} parent=1 // pred_region
      %74 = vsyncadd [#allocation9], 0
      %s75 = sshll.u32 %s5, 4
      %s76 = int_to_ptr.hbm [resolvable:$true] %s75
      %s77 = sshll.u32 [#allocation10], 4
      %s78 = int_to_ptr.vmem [resolvable:$true] %s77
      %83 = dma.hbm_to_vmem [thread:$0]  %s76, 2048, %s78, [#allocation9], 128, 128, 8
    $region25: #{tpu_custom_call.1} parent=1 // pred_fallthru
      _
    // Predicated region
    $region26: #{tpu_custom_call.1} parent=1 // pred_check
      _
    $region27: #{tpu_custom_call.1} parent=1 // pred_check_branch
      %85 = sbr.rel (0) target = $region29
    $region28: #{tpu_custom_call.1} parent=1 // pred_region
      _
    $region29: #{tpu_custom_call.1} parent=1 // pred_fallthru
      _
    // Predicated region
    $region30: #{tpu_custom_call.1} parent=1 // pred_check
      _
    $region31: #{tpu_custom_call.1} parent=1 // pred_check_branch
      %87 = sbr.rel (0) target = $region33
    $region32: #{tpu_custom_call.1} parent=1 // pred_region
      %89 = vsyncadd [#allocation12], 0
      %s90 = sshll.u32 %s7, 4
      %s91 = int_to_ptr.hbm [resolvable:$true] %s90
      %s92 = sshll.u32 [#allocation11], 4
      %s93 = int_to_ptr.vmem [resolvable:$true] %s92
      %98 = dma.hbm_to_vmem [thread:$0]  %s91, 2048, %s93, [#allocation12], 128, 128, 8
    $region33: #{tpu_custom_call.1} parent=1 // pred_fallthru
      _
    // Predicated region
    $region34: #{tpu_custom_call.1} parent=1 // pred_check
      _
    $region35: #{tpu_custom_call.1} parent=1 // pred_check_branch
      %100 = sbr.rel (0) target = $region37
    $region36: #{tpu_custom_call.1} parent=1 // pred_region
      _
    $region37: #{tpu_custom_call.1} parent=1 // pred_fallthru
      _
    // Predicated region
    $region38: #{tpu_custom_call.1} parent=1 // pred_check
      _
    $region39: #{tpu_custom_call.1} parent=1 // pred_check_branch
      %102 = sbr.rel (0) target = $region41
    $region40: #{tpu_custom_call.1} parent=1 // pred_region
      %104 = dma.done [#allocation3], 12288
    $region41: #{tpu_custom_call.1} parent=1 // pred_fallthru
      _
    // Predicated region
    $region42: #{tpu_custom_call.1} parent=1 // pred_check
      _
    $region43: #{tpu_custom_call.1} parent=1 // pred_check_branch
      %106 = sbr.rel (0) target = $region45
    $region44: #{tpu_custom_call.1} parent=1 // pred_region
      %108 = dma.done [#allocation6], 24576
    $region45: #{tpu_custom_call.1} parent=1 // pred_fallthru
      _
    // Predicated region
    $region46: #{tpu_custom_call.1} parent=1 // pred_check
      _
    $region47: #{tpu_custom_call.1} parent=1 // pred_check_branch
      %110 = sbr.rel (0) target = $region49
    $region48: #{tpu_custom_call.1} parent=1 // pred_region
      %112 = dma.done [#allocation6], 32
    $region49: #{tpu_custom_call.1} parent=1 // pred_fallthru
      _
    // Predicated region
    $region50: #{tpu_custom_call.1} parent=1 // pred_check
      _
    $region51: #{tpu_custom_call.1} parent=1 // pred_check_branch
      %114 = sbr.rel (0) target = $region53
    $region52: #{tpu_custom_call.1} parent=1 // pred_region
      %116 = dma.done [#allocation9], 4096
    $region53: #{tpu_custom_call.1} parent=1 // pred_fallthru
      _
    // Predicated region
    $region54: #{tpu_custom_call.1} parent=1 // pred_check
      _
    $region55: #{tpu_custom_call.1} parent=1 // pred_check_branch
      %118 = sbr.rel (0) target = $region57
    $region56: #{tpu_custom_call.1} parent=1 // pred_region
      %120 = dma.done [#allocation9], 2048
    $region57: #{tpu_custom_call.1} parent=1 // pred_fallthru
      _
    // Predicated region
    $region58: #{tpu_custom_call.1} parent=1 // pred_check
      _
    $region59: #{tpu_custom_call.1} parent=1 // pred_check_branch
      %122 = sbr.rel (0) target = $region61
    $region60: #{tpu_custom_call.1} parent=1 // pred_region
      %124 = dma.done [#allocation12], 2048
    $region61: #{tpu_custom_call.1} parent=1 // pred_fallthru
      _
    %v125 = vld [vmem:[#allocation2] sm:$0xff]
    %v126 = vld [vmem:[#allocation2 + $0x8] sm:$0xff]
    %v127 = vld [vmem:[#allocation2 + $0x10] sm:$0xff]
    %v128 = vld [vmem:[#allocation2 + $0x18] sm:$0xff]
    %v129 = vld [vmem:[#allocation2 + $0x20] sm:$0xff]
    %v130 = vld [vmem:[#allocation2 + $0x28] sm:$0xff]
    %v131 = vld [vmem:[#allocation2 + $0x30] sm:$0xff]
    %v132 = vld [vmem:[#allocation2 + $0x38] sm:$0xff]
    %v133 = vld [vmem:[#allocation2 + $0x40] sm:$0xff]
    %v134 = vld [vmem:[#allocation2 + $0x48] sm:$0xff]
    %v135 = vld [vmem:[#allocation2 + $0x50] sm:$0xff]
    %v136 = vld [vmem:[#allocation2 + $0x58] sm:$0xff]
    %v137 = vld [vmem:[#allocation2 + $0x60] sm:$0xff]
    %v138 = vld [vmem:[#allocation2 + $0x68] sm:$0xff]
    %v139 = vld [vmem:[#allocation2 + $0x70] sm:$0xff]
    %v140 = vld [vmem:[#allocation2 + $0x78] sm:$0xff]
    %v141 = vld [vmem:[#allocation2 + $0x80] sm:$0xff]
    %v142 = vld [vmem:[#allocation2 + $0x88] sm:$0xff]
    %v143 = vld [vmem:[#allocation2 + $0x90] sm:$0xff]
    %v144 = vld [vmem:[#allocation2 + $0x98] sm:$0xff]
    %v145 = vld [vmem:[#allocation2 + $0xa0] sm:$0xff]
    %v146 = vld [vmem:[#allocation2 + $0xa8] sm:$0xff]
    %v147 = vld [vmem:[#allocation2 + $0xb0] sm:$0xff]
    %v148 = vld [vmem:[#allocation2 + $0xb8] sm:$0xff]
    %v149 = vld [vmem:[#allocation2 + $0xc0] sm:$0xff]
    %v150 = vld [vmem:[#allocation2 + $0xc8] sm:$0xff]
    %v151 = vld [vmem:[#allocation2 + $0xd0] sm:$0xff]
    %v152 = vld [vmem:[#allocation2 + $0xd8] sm:$0xff]
    %v153 = vld [vmem:[#allocation2 + $0xe0] sm:$0xff]
    %v154 = vld [vmem:[#allocation2 + $0xe8] sm:$0xff]
    %v155 = vld [vmem:[#allocation2 + $0xf0] sm:$0xff]
    %v156 = vld [vmem:[#allocation2 + $0xf8] sm:$0xff]
    %v157 = vld [vmem:[#allocation2 + $0x100] sm:$0xff]
    %v158 = vld [vmem:[#allocation2 + $0x108] sm:$0xff]
    %v159 = vld [vmem:[#allocation2 + $0x110] sm:$0xff]
    %v160 = vld [vmem:[#allocation2 + $0x118] sm:$0xff]
    %v161 = vld [vmem:[#allocation2 + $0x120] sm:$0xff]
    %v162 = vld [vmem:[#allocation2 + $0x128] sm:$0xff]
    %v163 = vld [vmem:[#allocation2 + $0x130] sm:$0xff]
    %v164 = vld [vmem:[#allocation2 + $0x138] sm:$0xff]
    %v165 = vld [vmem:[#allocation2 + $0x140] sm:$0xff]
    %v166 = vld [vmem:[#allocation2 + $0x148] sm:$0xff]
    %v167 = vld [vmem:[#allocation2 + $0x150] sm:$0xff]
    %v168 = vld [vmem:[#allocation2 + $0x158] sm:$0xff]
    %v169 = vld [vmem:[#allocation2 + $0x160] sm:$0xff]
    %v170 = vld [vmem:[#allocation2 + $0x168] sm:$0xff]
    %v171 = vld [vmem:[#allocation2 + $0x170] sm:$0xff]
    %v172 = vld [vmem:[#allocation2 + $0x178] sm:$0xff]
    %v173 = vld [vmem:[#allocation2 + $0x180] sm:$0xff]
    %v174 = vld [vmem:[#allocation2 + $0x188] sm:$0xff]
    %v175 = vld [vmem:[#allocation2 + $0x190] sm:$0xff]
    %v176 = vld [vmem:[#allocation2 + $0x198] sm:$0xff]
    %v177 = vld [vmem:[#allocation2 + $0x1a0] sm:$0xff]
    %v178 = vld [vmem:[#allocation2 + $0x1a8] sm:$0xff]
    %v179 = vld [vmem:[#allocation2 + $0x1b0] sm:$0xff]
    %v180 = vld [vmem:[#allocation2 + $0x1b8] sm:$0xff]
    %v181 = vld [vmem:[#allocation2 + $0x1c0] sm:$0xff]
    %v182 = vld [vmem:[#allocation2 + $0x1c8] sm:$0xff]
    %v183 = vld [vmem:[#allocation2 + $0x1d0] sm:$0xff]
    %v184 = vld [vmem:[#allocation2 + $0x1d8] sm:$0xff]
    %v185 = vld [vmem:[#allocation2 + $0x1e0] sm:$0xff]
    %v186 = vld [vmem:[#allocation2 + $0x1e8] sm:$0xff]
    %v187 = vld [vmem:[#allocation2 + $0x1f0] sm:$0xff]
    %v188 = vld [vmem:[#allocation2 + $0x1f8] sm:$0xff]
    %v189 = vld [vmem:[#allocation2 + $0x200] sm:$0xff]
    %v190 = vld [vmem:[#allocation2 + $0x208] sm:$0xff]
    %v191 = vld [vmem:[#allocation2 + $0x210] sm:$0xff]
    %v192 = vld [vmem:[#allocation2 + $0x218] sm:$0xff]
    %v193 = vld [vmem:[#allocation2 + $0x220] sm:$0xff]
    %v194 = vld [vmem:[#allocation2 + $0x228] sm:$0xff]
    %v195 = vld [vmem:[#allocation2 + $0x230] sm:$0xff]
    %v196 = vld [vmem:[#allocation2 + $0x238] sm:$0xff]
    %v197 = vld [vmem:[#allocation2 + $0x240] sm:$0xff]
    %v198 = vld [vmem:[#allocation2 + $0x248] sm:$0xff]
    %v199 = vld [vmem:[#allocation2 + $0x250] sm:$0xff]
    %v200 = vld [vmem:[#allocation2 + $0x258] sm:$0xff]
    %v201 = vld [vmem:[#allocation2 + $0x260] sm:$0xff]
    %v202 = vld [vmem:[#allocation2 + $0x268] sm:$0xff]
    %v203 = vld [vmem:[#allocation2 + $0x270] sm:$0xff]
    %v204 = vld [vmem:[#allocation2 + $0x278] sm:$0xff]
    %v205 = vld [vmem:[#allocation2 + $0x280] sm:$0xff]
    %v206 = vld [vmem:[#allocation2 + $0x288] sm:$0xff]
    %v207 = vld [vmem:[#allocation2 + $0x290] sm:$0xff]
    %v208 = vld [vmem:[#allocation2 + $0x298] sm:$0xff]
    %v209 = vld [vmem:[#allocation2 + $0x2a0] sm:$0xff]
    %v210 = vld [vmem:[#allocation2 + $0x2a8] sm:$0xff]
    %v211 = vld [vmem:[#allocation2 + $0x2b0] sm:$0xff]
    %v212 = vld [vmem:[#allocation2 + $0x2b8] sm:$0xff]
    %v213 = vld [vmem:[#allocation2 + $0x2c0] sm:$0xff]
    %v214 = vld [vmem:[#allocation2 + $0x2c8] sm:$0xff]
    %v215 = vld [vmem:[#allocation2 + $0x2d0] sm:$0xff]
    %v216 = vld [vmem:[#allocation2 + $0x2d8] sm:$0xff]
    %v217 = vld [vmem:[#allocation2 + $0x2e0] sm:$0xff]
    %v218 = vld [vmem:[#allocation2 + $0x2e8] sm:$0xff]
    %v219 = vld [vmem:[#allocation2 + $0x2f0] sm:$0xff]
    %v220 = vld [vmem:[#allocation2 + $0x2f8] sm:$0xff]
    %v221 = vld [vmem:[#allocation5] sm:$0xff]
    %v222 = vld [vmem:[#allocation5 + $0x8] sm:$0xff]
    %v223 = vld [vmem:[#allocation5 + $0x10] sm:$0xff]
    %v224 = vld [vmem:[#allocation5 + $0x18] sm:$0xff]
    %v225 = vld [vmem:[#allocation5 + $0x20] sm:$0xff]
    %v226 = vld [vmem:[#allocation5 + $0x28] sm:$0xff]
    %v227 = vld [vmem:[#allocation5 + $0x30] sm:$0xff]
    %v228 = vld [vmem:[#allocation5 + $0x38] sm:$0xff]
    %v229 = vld [vmem:[#allocation5 + $0x40] sm:$0xff]
    %v230 = vld [vmem:[#allocation5 + $0x48] sm:$0xff]
    %v231 = vld [vmem:[#allocation5 + $0x50] sm:$0xff]
    %v232 = vld [vmem:[#allocation5 + $0x58] sm:$0xff]
    %v233 = vld [vmem:[#allocation5 + $0x60] sm:$0xff]
    %v234 = vld [vmem:[#allocation5 + $0x68] sm:$0xff]
    %v235 = vld [vmem:[#allocation5 + $0x70] sm:$0xff]
    %v236 = vld [vmem:[#allocation5 + $0x78] sm:$0xff]
    %v237 = vld [vmem:[#allocation5 + $0x80] sm:$0xff]
    %v238 = vld [vmem:[#allocation5 + $0x88] sm:$0xff]
    %v239 = vld [vmem:[#allocation5 + $0x90] sm:$0xff]
    %v240 = vld [vmem:[#allocation5 + $0x98] sm:$0xff]
    %v241 = vld [vmem:[#allocation5 + $0xa0] sm:$0xff]
    %v242 = vld [vmem:[#allocation5 + $0xa8] sm:$0xff]
    %v243 = vld [vmem:[#allocation5 + $0xb0] sm:$0xff]
    %v244 = vld [vmem:[#allocation5 + $0xb8] sm:$0xff]
    %v245 = vld [vmem:[#allocation5 + $0xc0] sm:$0xff]
    %v246 = vld [vmem:[#allocation5 + $0xc8] sm:$0xff]
    %v247 = vld [vmem:[#allocation5 + $0xd0] sm:$0xff]
    %v248 = vld [vmem:[#allocation5 + $0xd8] sm:$0xff]
    %v249 = vld [vmem:[#allocation5 + $0xe0] sm:$0xff]
    %v250 = vld [vmem:[#allocation5 + $0xe8] sm:$0xff]
    %v251 = vld [vmem:[#allocation5 + $0xf0] sm:$0xff]
    %v252 = vld [vmem:[#allocation5 + $0xf8] sm:$0xff]
    %v253 = vld [vmem:[#allocation5 + $0x100] sm:$0xff]
    %v254 = vld [vmem:[#allocation5 + $0x108] sm:$0xff]
    %v255 = vld [vmem:[#allocation5 + $0x110] sm:$0xff]
    %v256 = vld [vmem:[#allocation5 + $0x118] sm:$0xff]
    %v257 = vld [vmem:[#allocation5 + $0x120] sm:$0xff]
    %v258 = vld [vmem:[#allocation5 + $0x128] sm:$0xff]
    %v259 = vld [vmem:[#allocation5 + $0x130] sm:$0xff]
    %v260 = vld [vmem:[#allocation5 + $0x138] sm:$0xff]
    %v261 = vld [vmem:[#allocation5 + $0x140] sm:$0xff]
    %v262 = vld [vmem:[#allocation5 + $0x148] sm:$0xff]
    %v263 = vld [vmem:[#allocation5 + $0x150] sm:$0xff]
    %v264 = vld [vmem:[#allocation5 + $0x158] sm:$0xff]
    %v265 = vld [vmem:[#allocation5 + $0x160] sm:$0xff]
    %v266 = vld [vmem:[#allocation5 + $0x168] sm:$0xff]
    %v267 = vld [vmem:[#allocation5 + $0x170] sm:$0xff]
    %v268 = vld [vmem:[#allocation5 + $0x178] sm:$0xff]
    %v269 = vld [vmem:[#allocation5 + $0x180] sm:$0xff]
    %v270 = vld [vmem:[#allocation5 + $0x188] sm:$0xff]
    %v271 = vld [vmem:[#allocation5 + $0x190] sm:$0xff]
    %v272 = vld [vmem:[#allocation5 + $0x198] sm:$0xff]
    %v273 = vld [vmem:[#allocation5 + $0x1a0] sm:$0xff]
    %v274 = vld [vmem:[#allocation5 + $0x1a8] sm:$0xff]
    %v275 = vld [vmem:[#allocation5 + $0x1b0] sm:$0xff]
    %v276 = vld [vmem:[#allocation5 + $0x1b8] sm:$0xff]
    %v277 = vld [vmem:[#allocation5 + $0x1c0] sm:$0xff]
    %v278 = vld [vmem:[#allocation5 + $0x1c8] sm:$0xff]
    %v279 = vld [vmem:[#allocation5 + $0x1d0] sm:$0xff]
    %v280 = vld [vmem:[#allocation5 + $0x1d8] sm:$0xff]
    %v281 = vld [vmem:[#allocation5 + $0x1e0] sm:$0xff]
    %v282 = vld [vmem:[#allocation5 + $0x1e8] sm:$0xff]
    %v283 = vld [vmem:[#allocation5 + $0x1f0] sm:$0xff]
    %v284 = vld [vmem:[#allocation5 + $0x1f8] sm:$0xff]
    %v285 = vld [vmem:[#allocation5 + $0x200] sm:$0xff]
    %v286 = vld [vmem:[#allocation5 + $0x208] sm:$0xff]
    %v287 = vld [vmem:[#allocation5 + $0x210] sm:$0xff]
    %v288 = vld [vmem:[#allocation5 + $0x218] sm:$0xff]
    %v289 = vld [vmem:[#allocation5 + $0x220] sm:$0xff]
    %v290 = vld [vmem:[#allocation5 + $0x228] sm:$0xff]
    %v291 = vld [vmem:[#allocation5 + $0x230] sm:$0xff]
    %v292 = vld [vmem:[#allocation5 + $0x238] sm:$0xff]
    %v293 = vld [vmem:[#allocation5 + $0x240] sm:$0xff]
    %v294 = vld [vmem:[#allocation5 + $0x248] sm:$0xff]
    %v295 = vld [vmem:[#allocation5 + $0x250] sm:$0xff]
    %v296 = vld [vmem:[#allocation5 + $0x258] sm:$0xff]
    %v297 = vld [vmem:[#allocation5 + $0x260] sm:$0xff]
    %v298 = vld [vmem:[#allocation5 + $0x268] sm:$0xff]
    %v299 = vld [vmem:[#allocation5 + $0x270] sm:$0xff]
    %v300 = vld [vmem:[#allocation5 + $0x278] sm:$0xff]
    %v301 = vld [vmem:[#allocation5 + $0x280] sm:$0xff]
    %v302 = vld [vmem:[#allocation5 + $0x288] sm:$0xff]
    %v303 = vld [vmem:[#allocation5 + $0x290] sm:$0xff]
    %v304 = vld [vmem:[#allocation5 + $0x298] sm:$0xff]
    %v305 = vld [vmem:[#allocation5 + $0x2a0] sm:$0xff]
    %v306 = vld [vmem:[#allocation5 + $0x2a8] sm:$0xff]
    %v307 = vld [vmem:[#allocation5 + $0x2b0] sm:$0xff]
    %v308 = vld [vmem:[#allocation5 + $0x2b8] sm:$0xff]
    %v309 = vld [vmem:[#allocation5 + $0x2c0] sm:$0xff]
    %v310 = vld [vmem:[#allocation5 + $0x2c8] sm:$0xff]
    %v311 = vld [vmem:[#allocation5 + $0x2d0] sm:$0xff]
    %v312 = vld [vmem:[#allocation5 + $0x2d8] sm:$0xff]
    %v313 = vld [vmem:[#allocation5 + $0x2e0] sm:$0xff]
    %v314 = vld [vmem:[#allocation5 + $0x2e8] sm:$0xff]
    %v315 = vld [vmem:[#allocation5 + $0x2f0] sm:$0xff]
    %v316 = vld [vmem:[#allocation5 + $0x2f8] sm:$0xff]
    %v317 = vld [vmem:[#allocation5 + $0x300] sm:$0xff]
    %v318 = vld [vmem:[#allocation5 + $0x308] sm:$0xff]
    %v319 = vld [vmem:[#allocation5 + $0x310] sm:$0xff]
    %v320 = vld [vmem:[#allocation5 + $0x318] sm:$0xff]
    %v321 = vld [vmem:[#allocation5 + $0x320] sm:$0xff]
    %v322 = vld [vmem:[#allocation5 + $0x328] sm:$0xff]
    %v323 = vld [vmem:[#allocation5 + $0x330] sm:$0xff]
    %v324 = vld [vmem:[#allocation5 + $0x338] sm:$0xff]
    %v325 = vld [vmem:[#allocation5 + $0x340] sm:$0xff]
    %v326 = vld [vmem:[#allocation5 + $0x348] sm:$0xff]
    %v327 = vld [vmem:[#allocation5 + $0x350] sm:$0xff]
    %v328 = vld [vmem:[#allocation5 + $0x358] sm:$0xff]
    %v329 = vld [vmem:[#allocation5 + $0x360] sm:$0xff]
    %v330 = vld [vmem:[#allocation5 + $0x368] sm:$0xff]
    %v331 = vld [vmem:[#allocation5 + $0x370] sm:$0xff]
    %v332 = vld [vmem:[#allocation5 + $0x378] sm:$0xff]
    %v333 = vld [vmem:[#allocation5 + $0x380] sm:$0xff]
    %v334 = vld [vmem:[#allocation5 + $0x388] sm:$0xff]
    %v335 = vld [vmem:[#allocation5 + $0x390] sm:$0xff]
    %v336 = vld [vmem:[#allocation5 + $0x398] sm:$0xff]
    %v337 = vld [vmem:[#allocation5 + $0x3a0] sm:$0xff]
    %v338 = vld [vmem:[#allocation5 + $0x3a8] sm:$0xff]
    %v339 = vld [vmem:[#allocation5 + $0x3b0] sm:$0xff]
    %v340 = vld [vmem:[#allocation5 + $0x3b8] sm:$0xff]
    %v341 = vld [vmem:[#allocation5 + $0x3c0] sm:$0xff]
    %v342 = vld [vmem:[#allocation5 + $0x3c8] sm:$0xff]
    %v343 = vld [vmem:[#allocation5 + $0x3d0] sm:$0xff]
    %v344 = vld [vmem:[#allocation5 + $0x3d8] sm:$0xff]
    %v345 = vld [vmem:[#allocation5 + $0x3e0] sm:$0xff]
    %v346 = vld [vmem:[#allocation5 + $0x3e8] sm:$0xff]
    %v347 = vld [vmem:[#allocation5 + $0x3f0] sm:$0xff]
    %v348 = vld [vmem:[#allocation5 + $0x3f8] sm:$0xff]
    %v349 = vld [vmem:[#allocation5 + $0x400] sm:$0xff]
    %v350 = vld [vmem:[#allocation5 + $0x408] sm:$0xff]
    %v351 = vld [vmem:[#allocation5 + $0x410] sm:$0xff]
    %v352 = vld [vmem:[#allocation5 + $0x418] sm:$0xff]
    %v353 = vld [vmem:[#allocation5 + $0x420] sm:$0xff]
    %v354 = vld [vmem:[#allocation5 + $0x428] sm:$0xff]
    %v355 = vld [vmem:[#allocation5 + $0x430] sm:$0xff]
    %v356 = vld [vmem:[#allocation5 + $0x438] sm:$0xff]
    %v357 = vld [vmem:[#allocation5 + $0x440] sm:$0xff]
    %v358 = vld [vmem:[#allocation5 + $0x448] sm:$0xff]
    %v359 = vld [vmem:[#allocation5 + $0x450] sm:$0xff]
    %v360 = vld [vmem:[#allocation5 + $0x458] sm:$0xff]
    %v361 = vld [vmem:[#allocation5 + $0x460] sm:$0xff]
    %v362 = vld [vmem:[#allocation5 + $0x468] sm:$0xff]
    %v363 = vld [vmem:[#allocation5 + $0x470] sm:$0xff]
    %v364 = vld [vmem:[#allocation5 + $0x478] sm:$0xff]
    %v365 = vld [vmem:[#allocation5 + $0x480] sm:$0xff]
    %v366 = vld [vmem:[#allocation5 + $0x488] sm:$0xff]
    %v367 = vld [vmem:[#allocation5 + $0x490] sm:$0xff]
    %v368 = vld [vmem:[#allocation5 + $0x498] sm:$0xff]
    %v369 = vld [vmem:[#allocation5 + $0x4a0] sm:$0xff]
    %v370 = vld [vmem:[#allocation5 + $0x4a8] sm:$0xff]
    %v371 = vld [vmem:[#allocation5 + $0x4b0] sm:$0xff]
    %v372 = vld [vmem:[#allocation5 + $0x4b8] sm:$0xff]
    %v373 = vld [vmem:[#allocation5 + $0x4c0] sm:$0xff]
    %v374 = vld [vmem:[#allocation5 + $0x4c8] sm:$0xff]
    %v375 = vld [vmem:[#allocation5 + $0x4d0] sm:$0xff]
    %v376 = vld [vmem:[#allocation5 + $0x4d8] sm:$0xff]
    %v377 = vld [vmem:[#allocation5 + $0x4e0] sm:$0xff]
    %v378 = vld [vmem:[#allocation5 + $0x4e8] sm:$0xff]
    %v379 = vld [vmem:[#allocation5 + $0x4f0] sm:$0xff]
    %v380 = vld [vmem:[#allocation5 + $0x4f8] sm:$0xff]
    %v381 = vld [vmem:[#allocation5 + $0x500] sm:$0xff]
    %v382 = vld [vmem:[#allocation5 + $0x508] sm:$0xff]
    %v383 = vld [vmem:[#allocation5 + $0x510] sm:$0xff]
    %v384 = vld [vmem:[#allocation5 + $0x518] sm:$0xff]
    %v385 = vld [vmem:[#allocation5 + $0x520] sm:$0xff]
    %v386 = vld [vmem:[#allocation5 + $0x528] sm:$0xff]
    %v387 = vld [vmem:[#allocation5 + $0x530] sm:$0xff]
    %v388 = vld [vmem:[#allocation5 + $0x538] sm:$0xff]
    %v389 = vld [vmem:[#allocation5 + $0x540] sm:$0xff]
    %v390 = vld [vmem:[#allocation5 + $0x548] sm:$0xff]
    %v391 = vld [vmem:[#allocation5 + $0x550] sm:$0xff]
    %v392 = vld [vmem:[#allocation5 + $0x558] sm:$0xff]
    %v393 = vld [vmem:[#allocation5 + $0x560] sm:$0xff]
    %v394 = vld [vmem:[#allocation5 + $0x568] sm:$0xff]
    %v395 = vld [vmem:[#allocation5 + $0x570] sm:$0xff]
    %v396 = vld [vmem:[#allocation5 + $0x578] sm:$0xff]
    %v397 = vld [vmem:[#allocation5 + $0x580] sm:$0xff]
    %v398 = vld [vmem:[#allocation5 + $0x588] sm:$0xff]
    %v399 = vld [vmem:[#allocation5 + $0x590] sm:$0xff]
    %v400 = vld [vmem:[#allocation5 + $0x598] sm:$0xff]
    %v401 = vld [vmem:[#allocation5 + $0x5a0] sm:$0xff]
    %v402 = vld [vmem:[#allocation5 + $0x5a8] sm:$0xff]
    %v403 = vld [vmem:[#allocation5 + $0x5b0] sm:$0xff]
    %v404 = vld [vmem:[#allocation5 + $0x5b8] sm:$0xff]
    %v405 = vld [vmem:[#allocation5 + $0x5c0] sm:$0xff]
    %v406 = vld [vmem:[#allocation5 + $0x5c8] sm:$0xff]
    %v407 = vld [vmem:[#allocation5 + $0x5d0] sm:$0xff]
    %v408 = vld [vmem:[#allocation5 + $0x5d8] sm:$0xff]
    %v409 = vld [vmem:[#allocation5 + $0x5e0] sm:$0xff]
    %v410 = vld [vmem:[#allocation5 + $0x5e8] sm:$0xff]
    %v411 = vld [vmem:[#allocation5 + $0x5f0] sm:$0xff]
    %v412 = vld [vmem:[#allocation5 + $0x5f8] sm:$0xff]
    %v413 = vld [vmem:[#allocation7] sm:$0x3]
    %v415 = vperm.slane %v413, 0
    %v416 = vperm.slane %v413, 1
    %419 = vmatpush.msra.mxu0 %v251
    %420 = vmatpush.msra.mxu0 %v249
    %421 = vmatpush.msra.mxu0 %v247
    %422 = vmatpush.msra.mxu0 %v245
    %423 = vmatpush.msra.mxu0 %v243
    %424 = vmatpush.msra.mxu0 %v241
    %425 = vmatpush.msra.mxu0 %v239
    %426 = vmatpush.msra.mxu0 %v237
    %427 = vmatpush.msra.mxu0 %v235
    %428 = vmatpush.msra.mxu0 %v233
    %429 = vmatpush.msra.mxu0 %v231
    %430 = vmatpush.msra.mxu0 %v229
    %431 = vmatpush.msra.mxu0 %v227
    %432 = vmatpush.msra.mxu0 %v225
    %433 = vmatpush.msra.mxu0 %v223
    %434 = vmatpush.msra.mxu0 %v221
    %435 = vmatmul.f32.gmra.mxu0 %v125
    %v436 = vpop.f32.mrf.mxu0
    %v437 = vadd.f32 %v415, %v436
    %438 = vmatmul.f32.gmra.mxu0 %v131
    %v439 = vpop.f32.mrf.mxu0
    %v440 = vadd.f32 %v415, %v439
    %441 = vmatmul.f32.gmra.mxu0 %v137
    %v442 = vpop.f32.mrf.mxu0
    %v443 = vadd.f32 %v415, %v442
    %444 = vmatmul.f32.gmra.mxu0 %v143
    %v445 = vpop.f32.mrf.mxu0
    %v446 = vadd.f32 %v415, %v445
    %447 = vmatmul.f32.gmra.mxu0 %v149
    %v448 = vpop.f32.mrf.mxu0
    %v449 = vadd.f32 %v415, %v448
    %450 = vmatmul.f32.gmra.mxu0 %v155
    %v451 = vpop.f32.mrf.mxu0
    %v452 = vadd.f32 %v415, %v451
    %453 = vmatmul.f32.gmra.mxu0 %v161
    %v454 = vpop.f32.mrf.mxu0
    %v455 = vadd.f32 %v415, %v454
    %456 = vmatmul.f32.gmra.mxu0 %v167
    %v457 = vpop.f32.mrf.mxu0
    %v458 = vadd.f32 %v415, %v457
    %459 = vmatmul.f32.gmra.mxu0 %v173
    %v460 = vpop.f32.mrf.mxu0
    %v461 = vadd.f32 %v415, %v460
    %462 = vmatmul.f32.gmra.mxu0 %v179
    %v463 = vpop.f32.mrf.mxu0
    %v464 = vadd.f32 %v415, %v463
    %465 = vmatmul.f32.gmra.mxu0 %v185
    %v466 = vpop.f32.mrf.mxu0
    %v467 = vadd.f32 %v415, %v466
    %468 = vmatmul.f32.gmra.mxu0 %v191
    %v469 = vpop.f32.mrf.mxu0
    %v470 = vadd.f32 %v415, %v469
    %471 = vmatmul.f32.gmra.mxu0 %v197
    %v472 = vpop.f32.mrf.mxu0
    %v473 = vadd.f32 %v415, %v472
    %474 = vmatmul.f32.gmra.mxu0 %v203
    %v475 = vpop.f32.mrf.mxu0
    %v476 = vadd.f32 %v415, %v475
    %477 = vmatmul.f32.gmra.mxu0 %v209
    %v478 = vpop.f32.mrf.mxu0
    %v479 = vadd.f32 %v415, %v478
    %480 = vmatmul.f32.gmra.mxu0 %v215
    %v481 = vpop.f32.mrf.mxu0
    %v482 = vadd.f32 %v415, %v481
    %483 = vdwg.mxu0
    %484 = vmatpush.msra.mxu0 %v283
    %485 = vmatpush.msra.mxu0 %v281
    %486 = vmatpush.msra.mxu0 %v279
    %487 = vmatpush.msra.mxu0 %v277
    %488 = vmatpush.msra.mxu0 %v275
    %489 = vmatpush.msra.mxu0 %v273
    %490 = vmatpush.msra.mxu0 %v271
    %491 = vmatpush.msra.mxu0 %v269
    %492 = vmatpush.msra.mxu0 %v267
    %493 = vmatpush.msra.mxu0 %v265
    %494 = vmatpush.msra.mxu0 %v263
    %495 = vmatpush.msra.mxu0 %v261
    %496 = vmatpush.msra.mxu0 %v259
    %497 = vmatpush.msra.mxu0 %v257
    %498 = vmatpush.msra.mxu0 %v255
    %499 = vmatpush.msra.mxu0 %v253
    %500 = vmatmul.f32.gmra.mxu0 %v126
    %v501 = vpop.f32.mrf.mxu0
    %v502 = vadd.f32 %v437, %v501
    %503 = vmatmul.f32.gmra.mxu0 %v132
    %v504 = vpop.f32.mrf.mxu0
    %v505 = vadd.f32 %v440, %v504
    %506 = vmatmul.f32.gmra.mxu0 %v138
    %v507 = vpop.f32.mrf.mxu0
    %v508 = vadd.f32 %v443, %v507
    %509 = vmatmul.f32.gmra.mxu0 %v144
    %v510 = vpop.f32.mrf.mxu0
    %v511 = vadd.f32 %v446, %v510
    %512 = vmatmul.f32.gmra.mxu0 %v150
    %v513 = vpop.f32.mrf.mxu0
    %v514 = vadd.f32 %v449, %v513
    %515 = vmatmul.f32.gmra.mxu0 %v156
    %v516 = vpop.f32.mrf.mxu0
    %v517 = vadd.f32 %v452, %v516
    %518 = vmatmul.f32.gmra.mxu0 %v162
    %v519 = vpop.f32.mrf.mxu0
    %v520 = vadd.f32 %v455, %v519
    %521 = vmatmul.f32.gmra.mxu0 %v168
    %v522 = vpop.f32.mrf.mxu0
    %v523 = vadd.f32 %v458, %v522
    %524 = vmatmul.f32.gmra.mxu0 %v174
    %v525 = vpop.f32.mrf.mxu0
    %v526 = vadd.f32 %v461, %v525
    %527 = vmatmul.f32.gmra.mxu0 %v180
    %v528 = vpop.f32.mrf.mxu0
    %v529 = vadd.f32 %v464, %v528
    %530 = vmatmul.f32.gmra.mxu0 %v186
    %v531 = vpop.f32.mrf.mxu0
    %v532 = vadd.f32 %v467, %v531
    %533 = vmatmul.f32.gmra.mxu0 %v192
    %v534 = vpop.f32.mrf.mxu0
    %v535 = vadd.f32 %v470, %v534
    %536 = vmatmul.f32.gmra.mxu0 %v198
    %v537 = vpop.f32.mrf.mxu0
    %v538 = vadd.f32 %v473, %v537
    %539 = vmatmul.f32.gmra.mxu0 %v204
    %v540 = vpop.f32.mrf.mxu0
    %v541 = vadd.f32 %v476, %v540
    %542 = vmatmul.f32.gmra.mxu0 %v210
    %v543 = vpop.f32.mrf.mxu0
    %v544 = vadd.f32 %v479, %v543
    %545 = vmatmul.f32.gmra.mxu0 %v216
    %v546 = vpop.f32.mrf.mxu0
    %v547 = vadd.f32 %v482, %v546
    %548 = vdwg.mxu0
    %549 = vmatpush.msra.mxu0 %v315
    %550 = vmatpush.msra.mxu0 %v313
    %551 = vmatpush.msra.mxu0 %v311
    %552 = vmatpush.msra.mxu0 %v309
    %553 = vmatpush.msra.mxu0 %v307
    %554 = vmatpush.msra.mxu0 %v305
    %555 = vmatpush.msra.mxu0 %v303
    %556 = vmatpush.msra.mxu0 %v301
    %557 = vmatpush.msra.mxu0 %v299
    %558 = vmatpush.msra.mxu0 %v297
    %559 = vmatpush.msra.mxu0 %v295
    %560 = vmatpush.msra.mxu0 %v293
    %561 = vmatpush.msra.mxu0 %v291
    %562 = vmatpush.msra.mxu0 %v289
    %563 = vmatpush.msra.mxu0 %v287
    %564 = vmatpush.msra.mxu0 %v285
    %565 = vmatmul.f32.gmra.mxu0 %v127
    %v566 = vpop.f32.mrf.mxu0
    %v567 = vadd.f32 %v502, %v566
    %568 = vmatmul.f32.gmra.mxu0 %v133
    %v569 = vpop.f32.mrf.mxu0
    %v570 = vadd.f32 %v505, %v569
    %571 = vmatmul.f32.gmra.mxu0 %v139
    %v572 = vpop.f32.mrf.mxu0
    %v573 = vadd.f32 %v508, %v572
    %574 = vmatmul.f32.gmra.mxu0 %v145
    %v575 = vpop.f32.mrf.mxu0
    %v576 = vadd.f32 %v511, %v575
    %577 = vmatmul.f32.gmra.mxu0 %v151
    %v578 = vpop.f32.mrf.mxu0
    %v579 = vadd.f32 %v514, %v578
    %580 = vmatmul.f32.gmra.mxu0 %v157
    %v581 = vpop.f32.mrf.mxu0
    %v582 = vadd.f32 %v517, %v581
    %583 = vmatmul.f32.gmra.mxu0 %v163
    %v584 = vpop.f32.mrf.mxu0
    %v585 = vadd.f32 %v520, %v584
    %586 = vmatmul.f32.gmra.mxu0 %v169
    %v587 = vpop.f32.mrf.mxu0
    %v588 = vadd.f32 %v523, %v587
    %589 = vmatmul.f32.gmra.mxu0 %v175
    %v590 = vpop.f32.mrf.mxu0
    %v591 = vadd.f32 %v526, %v590
    %592 = vmatmul.f32.gmra.mxu0 %v181
    %v593 = vpop.f32.mrf.mxu0
    %v594 = vadd.f32 %v529, %v593
    %595 = vmatmul.f32.gmra.mxu0 %v187
    %v596 = vpop.f32.mrf.mxu0
    %v597 = vadd.f32 %v532, %v596
    %598 = vmatmul.f32.gmra.mxu0 %v193
    %v599 = vpop.f32.mrf.mxu0
    %v600 = vadd.f32 %v535, %v599
    %601 = vmatmul.f32.gmra.mxu0 %v199
    %v602 = vpop.f32.mrf.mxu0
    %v603 = vadd.f32 %v538, %v602
    %604 = vmatmul.f32.gmra.mxu0 %v205
    %v605 = vpop.f32.mrf.mxu0
    %v606 = vadd.f32 %v541, %v605
    %607 = vmatmul.f32.gmra.mxu0 %v211
    %v608 = vpop.f32.mrf.mxu0
    %v609 = vadd.f32 %v544, %v608
    %610 = vmatmul.f32.gmra.mxu0 %v217
    %v611 = vpop.f32.mrf.mxu0
    %v612 = vadd.f32 %v547, %v611
    %613 = vdwg.mxu0
    %614 = vmatpush.msra.mxu0 %v347
    %615 = vmatpush.msra.mxu0 %v345
    %616 = vmatpush.msra.mxu0 %v343
    %617 = vmatpush.msra.mxu0 %v341
    %618 = vmatpush.msra.mxu0 %v339
    %619 = vmatpush.msra.mxu0 %v337
    %620 = vmatpush.msra.mxu0 %v335
    %621 = vmatpush.msra.mxu0 %v333
    %622 = vmatpush.msra.mxu0 %v331
    %623 = vmatpush.msra.mxu0 %v329
    %624 = vmatpush.msra.mxu0 %v327
    %625 = vmatpush.msra.mxu0 %v325
    %626 = vmatpush.msra.mxu0 %v323
    %627 = vmatpush.msra.mxu0 %v321
    %628 = vmatpush.msra.mxu0 %v319
    %629 = vmatpush.msra.mxu0 %v317
    %630 = vmatmul.f32.gmra.mxu0 %v128
    %v631 = vpop.f32.mrf.mxu0
    %v632 = vadd.f32 %v567, %v631
    %633 = vmatmul.f32.gmra.mxu0 %v134
    %v634 = vpop.f32.mrf.mxu0
    %v635 = vadd.f32 %v570, %v634
    %636 = vmatmul.f32.gmra.mxu0 %v140
    %v637 = vpop.f32.mrf.mxu0
    %v638 = vadd.f32 %v573, %v637
    %639 = vmatmul.f32.gmra.mxu0 %v146
    %v640 = vpop.f32.mrf.mxu0
    %v641 = vadd.f32 %v576, %v640
    %642 = vmatmul.f32.gmra.mxu0 %v152
    %v643 = vpop.f32.mrf.mxu0
    %v644 = vadd.f32 %v579, %v643
    %645 = vmatmul.f32.gmra.mxu0 %v158
    %v646 = vpop.f32.mrf.mxu0
    %v647 = vadd.f32 %v582, %v646
    %648 = vmatmul.f32.gmra.mxu0 %v164
    %v649 = vpop.f32.mrf.mxu0
    %v650 = vadd.f32 %v585, %v649
    %651 = vmatmul.f32.gmra.mxu0 %v170
    %v652 = vpop.f32.mrf.mxu0
    %v653 = vadd.f32 %v588, %v652
    %654 = vmatmul.f32.gmra.mxu0 %v176
    %v655 = vpop.f32.mrf.mxu0
    %v656 = vadd.f32 %v591, %v655
    %657 = vmatmul.f32.gmra.mxu0 %v182
    %v658 = vpop.f32.mrf.mxu0
    %v659 = vadd.f32 %v594, %v658
    %660 = vmatmul.f32.gmra.mxu0 %v188
    %v661 = vpop.f32.mrf.mxu0
    %v662 = vadd.f32 %v597, %v661
    %663 = vmatmul.f32.gmra.mxu0 %v194
    %v664 = vpop.f32.mrf.mxu0
    %v665 = vadd.f32 %v600, %v664
    %666 = vmatmul.f32.gmra.mxu0 %v200
    %v667 = vpop.f32.mrf.mxu0
    %v668 = vadd.f32 %v603, %v667
    %669 = vmatmul.f32.gmra.mxu0 %v206
    %v670 = vpop.f32.mrf.mxu0
    %v671 = vadd.f32 %v606, %v670
    %672 = vmatmul.f32.gmra.mxu0 %v212
    %v673 = vpop.f32.mrf.mxu0
    %v674 = vadd.f32 %v609, %v673
    %675 = vmatmul.f32.gmra.mxu0 %v218
    %v676 = vpop.f32.mrf.mxu0
    %v677 = vadd.f32 %v612, %v676
    %678 = vdwg.mxu0
    %679 = vmatpush.msra.mxu0 %v379
    %680 = vmatpush.msra.mxu0 %v377
    %681 = vmatpush.msra.mxu0 %v375
    %682 = vmatpush.msra.mxu0 %v373
    %683 = vmatpush.msra.mxu0 %v371
    %684 = vmatpush.msra.mxu0 %v369
    %685 = vmatpush.msra.mxu0 %v367
    %686 = vmatpush.msra.mxu0 %v365
    %687 = vmatpush.msra.mxu0 %v363
    %688 = vmatpush.msra.mxu0 %v361
    %689 = vmatpush.msra.mxu0 %v359
    %690 = vmatpush.msra.mxu0 %v357
    %691 = vmatpush.msra.mxu0 %v355
    %692 = vmatpush.msra.mxu0 %v353
    %693 = vmatpush.msra.mxu0 %v351
    %694 = vmatpush.msra.mxu0 %v349
    %695 = vmatmul.f32.gmra.mxu0 %v129
    %v696 = vpop.f32.mrf.mxu0
    %v697 = vadd.f32 %v632, %v696
    %698 = vmatmul.f32.gmra.mxu0 %v135
    %v699 = vpop.f32.mrf.mxu0
    %v700 = vadd.f32 %v635, %v699
    %701 = vmatmul.f32.gmra.mxu0 %v141
    %v702 = vpop.f32.mrf.mxu0
    %v703 = vadd.f32 %v638, %v702
    %704 = vmatmul.f32.gmra.mxu0 %v147
    %v705 = vpop.f32.mrf.mxu0
    %v706 = vadd.f32 %v641, %v705
    %707 = vmatmul.f32.gmra.mxu0 %v153
    %v708 = vpop.f32.mrf.mxu0
    %v709 = vadd.f32 %v644, %v708
    %710 = vmatmul.f32.gmra.mxu0 %v159
    %v711 = vpop.f32.mrf.mxu0
    %v712 = vadd.f32 %v647, %v711
    %713 = vmatmul.f32.gmra.mxu0 %v165
    %v714 = vpop.f32.mrf.mxu0
    %v715 = vadd.f32 %v650, %v714
    %716 = vmatmul.f32.gmra.mxu0 %v171
    %v717 = vpop.f32.mrf.mxu0
    %v718 = vadd.f32 %v653, %v717
    %719 = vmatmul.f32.gmra.mxu0 %v177
    %v720 = vpop.f32.mrf.mxu0
    %v721 = vadd.f32 %v656, %v720
    %722 = vmatmul.f32.gmra.mxu0 %v183
    %v723 = vpop.f32.mrf.mxu0
    %v724 = vadd.f32 %v659, %v723
    %725 = vmatmul.f32.gmra.mxu0 %v189
    %v726 = vpop.f32.mrf.mxu0
    %v727 = vadd.f32 %v662, %v726
    %728 = vmatmul.f32.gmra.mxu0 %v195
    %v729 = vpop.f32.mrf.mxu0
    %v730 = vadd.f32 %v665, %v729
    %731 = vmatmul.f32.gmra.mxu0 %v201
    %v732 = vpop.f32.mrf.mxu0
    %v733 = vadd.f32 %v668, %v732
    %734 = vmatmul.f32.gmra.mxu0 %v207
    %v735 = vpop.f32.mrf.mxu0
    %v736 = vadd.f32 %v671, %v735
    %737 = vmatmul.f32.gmra.mxu0 %v213
    %v738 = vpop.f32.mrf.mxu0
    %v739 = vadd.f32 %v674, %v738
    %740 = vmatmul.f32.gmra.mxu0 %v219
    %v741 = vpop.f32.mrf.mxu0
    %v742 = vadd.f32 %v677, %v741
    %743 = vdwg.mxu0
    %744 = vmatpush.msra.mxu0 %v411
    %745 = vmatpush.msra.mxu0 %v409
    %746 = vmatpush.msra.mxu0 %v407
    %747 = vmatpush.msra.mxu0 %v405
    %748 = vmatpush.msra.mxu0 %v403
    %749 = vmatpush.msra.mxu0 %v401
    %750 = vmatpush.msra.mxu0 %v399
    %751 = vmatpush.msra.mxu0 %v397
    %752 = vmatpush.msra.mxu0 %v395
    %753 = vmatpush.msra.mxu0 %v393
    %754 = vmatpush.msra.mxu0 %v391
    %755 = vmatpush.msra.mxu0 %v389
    %756 = vmatpush.msra.mxu0 %v387
    %757 = vmatpush.msra.mxu0 %v385
    %758 = vmatpush.msra.mxu0 %v383
    %759 = vmatpush.msra.mxu0 %v381
    %760 = vmatmul.f32.gmra.mxu0 %v130
    %v761 = vpop.f32.mrf.mxu0
    %v762 = vadd.f32 %v697, %v761
    %763 = vmatmul.f32.gmra.mxu0 %v136
    %v764 = vpop.f32.mrf.mxu0
    %v765 = vadd.f32 %v700, %v764
    %766 = vmatmul.f32.gmra.mxu0 %v142
    %v767 = vpop.f32.mrf.mxu0
    %v768 = vadd.f32 %v703, %v767
    %769 = vmatmul.f32.gmra.mxu0 %v148
    %v770 = vpop.f32.mrf.mxu0
    %v771 = vadd.f32 %v706, %v770
    %772 = vmatmul.f32.gmra.mxu0 %v154
    %v773 = vpop.f32.mrf.mxu0
    %v774 = vadd.f32 %v709, %v773
    %775 = vmatmul.f32.gmra.mxu0 %v160
    %v776 = vpop.f32.mrf.mxu0
    %v777 = vadd.f32 %v712, %v776
    %778 = vmatmul.f32.gmra.mxu0 %v166
    %v779 = vpop.f32.mrf.mxu0
    %v780 = vadd.f32 %v715, %v779
    %781 = vmatmul.f32.gmra.mxu0 %v172
    %v782 = vpop.f32.mrf.mxu0
    %v783 = vadd.f32 %v718, %v782
    %784 = vmatmul.f32.gmra.mxu0 %v178
    %v785 = vpop.f32.mrf.mxu0
    %v786 = vadd.f32 %v721, %v785
    %787 = vmatmul.f32.gmra.mxu0 %v184
    %v788 = vpop.f32.mrf.mxu0
    %v789 = vadd.f32 %v724, %v788
    %790 = vmatmul.f32.gmra.mxu0 %v190
    %v791 = vpop.f32.mrf.mxu0
    %v792 = vadd.f32 %v727, %v791
    %793 = vmatmul.f32.gmra.mxu0 %v196
    %v794 = vpop.f32.mrf.mxu0
    %v795 = vadd.f32 %v730, %v794
    %796 = vmatmul.f32.gmra.mxu0 %v202
    %v797 = vpop.f32.mrf.mxu0
    %v798 = vadd.f32 %v733, %v797
    %799 = vmatmul.f32.gmra.mxu0 %v208
    %v800 = vpop.f32.mrf.mxu0
    %v801 = vadd.f32 %v736, %v800
    %802 = vmatmul.f32.gmra.mxu0 %v214
    %v803 = vpop.f32.mrf.mxu0
    %v804 = vadd.f32 %v739, %v803
    %805 = vmatmul.f32.gmra.mxu0 %v220
    %v806 = vpop.f32.mrf.mxu0
    %v807 = vadd.f32 %v742, %v806
    %808 = vdwg.mxu0
    %809 = vmatpush.msra.mxu0 %v252
    %810 = vmatpush.msra.mxu0 %v250
    %811 = vmatpush.msra.mxu0 %v248
    %812 = vmatpush.msra.mxu0 %v246
    %813 = vmatpush.msra.mxu0 %v244
    %814 = vmatpush.msra.mxu0 %v242
    %815 = vmatpush.msra.mxu0 %v240
    %816 = vmatpush.msra.mxu0 %v238
    %817 = vmatpush.msra.mxu0 %v236
    %818 = vmatpush.msra.mxu0 %v234
    %819 = vmatpush.msra.mxu0 %v232
    %820 = vmatpush.msra.mxu0 %v230
    %821 = vmatpush.msra.mxu0 %v228
    %822 = vmatpush.msra.mxu0 %v226
    %823 = vmatpush.msra.mxu0 %v224
    %824 = vmatpush.msra.mxu0 %v222
    %825 = vmatmul.f32.gmra.mxu0 %v125
    %v826 = vpop.f32.mrf.mxu0
    %v827 = vadd.f32 %v416, %v826
    %828 = vmatmul.f32.gmra.mxu0 %v131
    %v829 = vpop.f32.mrf.mxu0
    %v830 = vadd.f32 %v416, %v829
    %831 = vmatmul.f32.gmra.mxu0 %v137
    %v832 = vpop.f32.mrf.mxu0
    %v833 = vadd.f32 %v416, %v832
    %834 = vmatmul.f32.gmra.mxu0 %v143
    %v835 = vpop.f32.mrf.mxu0
    %v836 = vadd.f32 %v416, %v835
    %837 = vmatmul.f32.gmra.mxu0 %v149
    %v838 = vpop.f32.mrf.mxu0
    %v839 = vadd.f32 %v416, %v838
    %840 = vmatmul.f32.gmra.mxu0 %v155
    %v841 = vpop.f32.mrf.mxu0
    %v842 = vadd.f32 %v416, %v841
    %843 = vmatmul.f32.gmra.mxu0 %v161
    %v844 = vpop.f32.mrf.mxu0
    %v845 = vadd.f32 %v416, %v844
    %846 = vmatmul.f32.gmra.mxu0 %v167
    %v847 = vpop.f32.mrf.mxu0
    %v848 = vadd.f32 %v416, %v847
    %849 = vmatmul.f32.gmra.mxu0 %v173
    %v850 = vpop.f32.mrf.mxu0
    %v851 = vadd.f32 %v416, %v850
    %852 = vmatmul.f32.gmra.mxu0 %v179
    %v853 = vpop.f32.mrf.mxu0
    %v854 = vadd.f32 %v416, %v853
    %855 = vmatmul.f32.gmra.mxu0 %v185
    %v856 = vpop.f32.mrf.mxu0
    %v857 = vadd.f32 %v416, %v856
    %858 = vmatmul.f32.gmra.mxu0 %v191
    %v859 = vpop.f32.mrf.mxu0
    %v860 = vadd.f32 %v416, %v859
    %861 = vmatmul.f32.gmra.mxu0 %v197
    %v862 = vpop.f32.mrf.mxu0
    %v863 = vadd.f32 %v416, %v862
    %864 = vmatmul.f32.gmra.mxu0 %v203
    %v865 = vpop.f32.mrf.mxu0
    %v866 = vadd.f32 %v416, %v865
    %867 = vmatmul.f32.gmra.mxu0 %v209
    %v868 = vpop.f32.mrf.mxu0
    %v869 = vadd.f32 %v416, %v868
    %870 = vmatmul.f32.gmra.mxu0 %v215
    %v871 = vpop.f32.mrf.mxu0
    %v872 = vadd.f32 %v416, %v871
    %873 = vdwg.mxu0
    %874 = vmatpush.msra.mxu0 %v284
    %875 = vmatpush.msra.mxu0 %v282
    %876 = vmatpush.msra.mxu0 %v280
    %877 = vmatpush.msra.mxu0 %v278
    %878 = vmatpush.msra.mxu0 %v276
    %879 = vmatpush.msra.mxu0 %v274
    %880 = vmatpush.msra.mxu0 %v272
    %881 = vmatpush.msra.mxu0 %v270
    %882 = vmatpush.msra.mxu0 %v268
    %883 = vmatpush.msra.mxu0 %v266
    %884 = vmatpush.msra.mxu0 %v264
    %885 = vmatpush.msra.mxu0 %v262
    %886 = vmatpush.msra.mxu0 %v260
    %887 = vmatpush.msra.mxu0 %v258
    %888 = vmatpush.msra.mxu0 %v256
    %889 = vmatpush.msra.mxu0 %v254
    %890 = vmatmul.f32.gmra.mxu0 %v126
    %v891 = vpop.f32.mrf.mxu0
    %v892 = vadd.f32 %v827, %v891
    %893 = vmatmul.f32.gmra.mxu0 %v132
    %v894 = vpop.f32.mrf.mxu0
    %v895 = vadd.f32 %v830, %v894
    %896 = vmatmul.f32.gmra.mxu0 %v138
    %v897 = vpop.f32.mrf.mxu0
    %v898 = vadd.f32 %v833, %v897
    %899 = vmatmul.f32.gmra.mxu0 %v144
    %v900 = vpop.f32.mrf.mxu0
    %v901 = vadd.f32 %v836, %v900
    %902 = vmatmul.f32.gmra.mxu0 %v150
    %v903 = vpop.f32.mrf.mxu0
    %v904 = vadd.f32 %v839, %v903
    %905 = vmatmul.f32.gmra.mxu0 %v156
    %v906 = vpop.f32.mrf.mxu0
    %v907 = vadd.f32 %v842, %v906
    %908 = vmatmul.f32.gmra.mxu0 %v162
    %v909 = vpop.f32.mrf.mxu0
    %v910 = vadd.f32 %v845, %v909
    %911 = vmatmul.f32.gmra.mxu0 %v168
    %v912 = vpop.f32.mrf.mxu0
    %v913 = vadd.f32 %v848, %v912
    %914 = vmatmul.f32.gmra.mxu0 %v174
    %v915 = vpop.f32.mrf.mxu0
    %v916 = vadd.f32 %v851, %v915
    %917 = vmatmul.f32.gmra.mxu0 %v180
    %v918 = vpop.f32.mrf.mxu0
    %v919 = vadd.f32 %v854, %v918
    %920 = vmatmul.f32.gmra.mxu0 %v186
    %v921 = vpop.f32.mrf.mxu0
    %v922 = vadd.f32 %v857, %v921
    %923 = vmatmul.f32.gmra.mxu0 %v192
    %v924 = vpop.f32.mrf.mxu0
    %v925 = vadd.f32 %v860, %v924
    %926 = vmatmul.f32.gmra.mxu0 %v198
    %v927 = vpop.f32.mrf.mxu0
    %v928 = vadd.f32 %v863, %v927
    %929 = vmatmul.f32.gmra.mxu0 %v204
    %v930 = vpop.f32.mrf.mxu0
    %v931 = vadd.f32 %v866, %v930
    %932 = vmatmul.f32.gmra.mxu0 %v210
    %v933 = vpop.f32.mrf.mxu0
    %v934 = vadd.f32 %v869, %v933
    %935 = vmatmul.f32.gmra.mxu0 %v216
    %v936 = vpop.f32.mrf.mxu0
    %v937 = vadd.f32 %v872, %v936
    %938 = vdwg.mxu0
    %939 = vmatpush.msra.mxu0 %v316
    %940 = vmatpush.msra.mxu0 %v314
    %941 = vmatpush.msra.mxu0 %v312
    %942 = vmatpush.msra.mxu0 %v310
    %943 = vmatpush.msra.mxu0 %v308
    %944 = vmatpush.msra.mxu0 %v306
    %945 = vmatpush.msra.mxu0 %v304
    %946 = vmatpush.msra.mxu0 %v302
    %947 = vmatpush.msra.mxu0 %v300
    %948 = vmatpush.msra.mxu0 %v298
    %949 = vmatpush.msra.mxu0 %v296
    %950 = vmatpush.msra.mxu0 %v294
    %951 = vmatpush.msra.mxu0 %v292
    %952 = vmatpush.msra.mxu0 %v290
    %953 = vmatpush.msra.mxu0 %v288
    %954 = vmatpush.msra.mxu0 %v286
    %955 = vmatmul.f32.gmra.mxu0 %v127
    %v956 = vpop.f32.mrf.mxu0
    %v957 = vadd.f32 %v892, %v956
    %958 = vmatmul.f32.gmra.mxu0 %v133
    %v959 = vpop.f32.mrf.mxu0
    %v960 = vadd.f32 %v895, %v959
    %961 = vmatmul.f32.gmra.mxu0 %v139
    %v962 = vpop.f32.mrf.mxu0
    %v963 = vadd.f32 %v898, %v962
    %964 = vmatmul.f32.gmra.mxu0 %v145
    %v965 = vpop.f32.mrf.mxu0
    %v966 = vadd.f32 %v901, %v965
    %967 = vmatmul.f32.gmra.mxu0 %v151
    %v968 = vpop.f32.mrf.mxu0
    %v969 = vadd.f32 %v904, %v968
    %970 = vmatmul.f32.gmra.mxu0 %v157
    %v971 = vpop.f32.mrf.mxu0
    %v972 = vadd.f32 %v907, %v971
    %973 = vmatmul.f32.gmra.mxu0 %v163
    %v974 = vpop.f32.mrf.mxu0
    %v975 = vadd.f32 %v910, %v974
    %976 = vmatmul.f32.gmra.mxu0 %v169
    %v977 = vpop.f32.mrf.mxu0
    %v978 = vadd.f32 %v913, %v977
    %979 = vmatmul.f32.gmra.mxu0 %v175
    %v980 = vpop.f32.mrf.mxu0
    %v981 = vadd.f32 %v916, %v980
    %982 = vmatmul.f32.gmra.mxu0 %v181
    %v983 = vpop.f32.mrf.mxu0
    %v984 = vadd.f32 %v919, %v983
    %985 = vmatmul.f32.gmra.mxu0 %v187
    %v986 = vpop.f32.mrf.mxu0
    %v987 = vadd.f32 %v922, %v986
    %988 = vmatmul.f32.gmra.mxu0 %v193
    %v989 = vpop.f32.mrf.mxu0
    %v990 = vadd.f32 %v925, %v989
    %991 = vmatmul.f32.gmra.mxu0 %v199
    %v992 = vpop.f32.mrf.mxu0
    %v993 = vadd.f32 %v928, %v992
    %994 = vmatmul.f32.gmra.mxu0 %v205
    %v995 = vpop.f32.mrf.mxu0
    %v996 = vadd.f32 %v931, %v995
    %997 = vmatmul.f32.gmra.mxu0 %v211
    %v998 = vpop.f32.mrf.mxu0
    %v999 = vadd.f32 %v934, %v998
    %1000 = vmatmul.f32.gmra.mxu0 %v217
    %v1001 = vpop.f32.mrf.mxu0
    %v1002 = vadd.f32 %v937, %v1001
    %1003 = vdwg.mxu0
    %1004 = vmatpush.msra.mxu0 %v348
    %1005 = vmatpush.msra.mxu0 %v346
    %1006 = vmatpush.msra.mxu0 %v344
    %1007 = vmatpush.msra.mxu0 %v342
    %1008 = vmatpush.msra.mxu0 %v340
    %1009 = vmatpush.msra.mxu0 %v338
    %1010 = vmatpush.msra.mxu0 %v336
    %1011 = vmatpush.msra.mxu0 %v334
    %1012 = vmatpush.msra.mxu0 %v332
    %1013 = vmatpush.msra.mxu0 %v330
    %1014 = vmatpush.msra.mxu0 %v328
    %1015 = vmatpush.msra.mxu0 %v326
    %1016 = vmatpush.msra.mxu0 %v324
    %1017 = vmatpush.msra.mxu0 %v322
    %1018 = vmatpush.msra.mxu0 %v320
    %1019 = vmatpush.msra.mxu0 %v318
    %1020 = vmatmul.f32.gmra.mxu0 %v128
    %v1021 = vpop.f32.mrf.mxu0
    %v1022 = vadd.f32 %v957, %v1021
    %1023 = vmatmul.f32.gmra.mxu0 %v134
    %v1024 = vpop.f32.mrf.mxu0
    %v1025 = vadd.f32 %v960, %v1024
    %1026 = vmatmul.f32.gmra.mxu0 %v140
    %v1027 = vpop.f32.mrf.mxu0
    %v1028 = vadd.f32 %v963, %v1027
    %1029 = vmatmul.f32.gmra.mxu0 %v146
    %v1030 = vpop.f32.mrf.mxu0
    %v1031 = vadd.f32 %v966, %v1030
    %1032 = vmatmul.f32.gmra.mxu0 %v152
    %v1033 = vpop.f32.mrf.mxu0
    %v1034 = vadd.f32 %v969, %v1033
    %1035 = vmatmul.f32.gmra.mxu0 %v158
    %v1036 = vpop.f32.mrf.mxu0
    %v1037 = vadd.f32 %v972, %v1036
    %1038 = vmatmul.f32.gmra.mxu0 %v164
    %v1039 = vpop.f32.mrf.mxu0
    %v1040 = vadd.f32 %v975, %v1039
    %1041 = vmatmul.f32.gmra.mxu0 %v170
    %v1042 = vpop.f32.mrf.mxu0
    %v1043 = vadd.f32 %v978, %v1042
    %1044 = vmatmul.f32.gmra.mxu0 %v176
    %v1045 = vpop.f32.mrf.mxu0
    %v1046 = vadd.f32 %v981, %v1045
    %1047 = vmatmul.f32.gmra.mxu0 %v182
    %v1048 = vpop.f32.mrf.mxu0
    %v1049 = vadd.f32 %v984, %v1048
    %1050 = vmatmul.f32.gmra.mxu0 %v188
    %v1051 = vpop.f32.mrf.mxu0
    %v1052 = vadd.f32 %v987, %v1051
    %1053 = vmatmul.f32.gmra.mxu0 %v194
    %v1054 = vpop.f32.mrf.mxu0
    %v1055 = vadd.f32 %v990, %v1054
    %1056 = vmatmul.f32.gmra.mxu0 %v200
    %v1057 = vpop.f32.mrf.mxu0
    %v1058 = vadd.f32 %v993, %v1057
    %1059 = vmatmul.f32.gmra.mxu0 %v206
    %v1060 = vpop.f32.mrf.mxu0
    %v1061 = vadd.f32 %v996, %v1060
    %1062 = vmatmul.f32.gmra.mxu0 %v212
    %v1063 = vpop.f32.mrf.mxu0
    %v1064 = vadd.f32 %v999, %v1063
    %1065 = vmatmul.f32.gmra.mxu0 %v218
    %v1066 = vpop.f32.mrf.mxu0
    %v1067 = vadd.f32 %v1002, %v1066
    %1068 = vdwg.mxu0
    %1069 = vmatpush.msra.mxu0 %v380
    %1070 = vmatpush.msra.mxu0 %v378
    %1071 = vmatpush.msra.mxu0 %v376
    %1072 = vmatpush.msra.mxu0 %v374
    %1073 = vmatpush.msra.mxu0 %v372
    %1074 = vmatpush.msra.mxu0 %v370
    %1075 = vmatpush.msra.mxu0 %v368
    %1076 = vmatpush.msra.mxu0 %v366
    %1077 = vmatpush.msra.mxu0 %v364
    %1078 = vmatpush.msra.mxu0 %v362
    %1079 = vmatpush.msra.mxu0 %v360
    %1080 = vmatpush.msra.mxu0 %v358
    %1081 = vmatpush.msra.mxu0 %v356
    %1082 = vmatpush.msra.mxu0 %v354
    %1083 = vmatpush.msra.mxu0 %v352
    %1084 = vmatpush.msra.mxu0 %v350
    %1085 = vmatmul.f32.gmra.mxu0 %v129
    %v1086 = vpop.f32.mrf.mxu0
    %v1087 = vadd.f32 %v1022, %v1086
    %1088 = vmatmul.f32.gmra.mxu0 %v135
    %v1089 = vpop.f32.mrf.mxu0
    %v1090 = vadd.f32 %v1025, %v1089
    %1091 = vmatmul.f32.gmra.mxu0 %v141
    %v1092 = vpop.f32.mrf.mxu0
    %v1093 = vadd.f32 %v1028, %v1092
    %1094 = vmatmul.f32.gmra.mxu0 %v147
    %v1095 = vpop.f32.mrf.mxu0
    %v1096 = vadd.f32 %v1031, %v1095
    %1097 = vmatmul.f32.gmra.mxu0 %v153
    %v1098 = vpop.f32.mrf.mxu0
    %v1099 = vadd.f32 %v1034, %v1098
    %1100 = vmatmul.f32.gmra.mxu0 %v159
    %v1101 = vpop.f32.mrf.mxu0
    %v1102 = vadd.f32 %v1037, %v1101
    %1103 = vmatmul.f32.gmra.mxu0 %v165
    %v1104 = vpop.f32.mrf.mxu0
    %v1105 = vadd.f32 %v1040, %v1104
    %1106 = vmatmul.f32.gmra.mxu0 %v171
    %v1107 = vpop.f32.mrf.mxu0
    %v1108 = vadd.f32 %v1043, %v1107
    %1109 = vmatmul.f32.gmra.mxu0 %v177
    %v1110 = vpop.f32.mrf.mxu0
    %v1111 = vadd.f32 %v1046, %v1110
    %1112 = vmatmul.f32.gmra.mxu0 %v183
    %v1113 = vpop.f32.mrf.mxu0
    %v1114 = vadd.f32 %v1049, %v1113
    %1115 = vmatmul.f32.gmra.mxu0 %v189
    %v1116 = vpop.f32.mrf.mxu0
    %v1117 = vadd.f32 %v1052, %v1116
    %1118 = vmatmul.f32.gmra.mxu0 %v195
    %v1119 = vpop.f32.mrf.mxu0
    %v1120 = vadd.f32 %v1055, %v1119
    %1121 = vmatmul.f32.gmra.mxu0 %v201
    %v1122 = vpop.f32.mrf.mxu0
    %v1123 = vadd.f32 %v1058, %v1122
    %1124 = vmatmul.f32.gmra.mxu0 %v207
    %v1125 = vpop.f32.mrf.mxu0
    %v1126 = vadd.f32 %v1061, %v1125
    %1127 = vmatmul.f32.gmra.mxu0 %v213
    %v1128 = vpop.f32.mrf.mxu0
    %v1129 = vadd.f32 %v1064, %v1128
    %1130 = vmatmul.f32.gmra.mxu0 %v219
    %v1131 = vpop.f32.mrf.mxu0
    %v1132 = vadd.f32 %v1067, %v1131
    %1133 = vdwg.mxu0
    %1134 = vmatpush.msra.mxu0 %v412
    %1135 = vmatpush.msra.mxu0 %v410
    %1136 = vmatpush.msra.mxu0 %v408
    %1137 = vmatpush.msra.mxu0 %v406
    %1138 = vmatpush.msra.mxu0 %v404
    %1139 = vmatpush.msra.mxu0 %v402
    %1140 = vmatpush.msra.mxu0 %v400
    %1141 = vmatpush.msra.mxu0 %v398
    %1142 = vmatpush.msra.mxu0 %v396
    %1143 = vmatpush.msra.mxu0 %v394
    %1144 = vmatpush.msra.mxu0 %v392
    %1145 = vmatpush.msra.mxu0 %v390
    %1146 = vmatpush.msra.mxu0 %v388
    %1147 = vmatpush.msra.mxu0 %v386
    %1148 = vmatpush.msra.mxu0 %v384
    %1149 = vmatpush.msra.mxu0 %v382
    %1150 = vmatmul.f32.gmra.mxu0 %v130
    %v1151 = vpop.f32.mrf.mxu0
    %v1152 = vadd.f32 %v1087, %v1151
    %1153 = vmatmul.f32.gmra.mxu0 %v136
    %v1154 = vpop.f32.mrf.mxu0
    %v1155 = vadd.f32 %v1090, %v1154
    %1156 = vmatmul.f32.gmra.mxu0 %v142
    %v1157 = vpop.f32.mrf.mxu0
    %v1158 = vadd.f32 %v1093, %v1157
    %1159 = vmatmul.f32.gmra.mxu0 %v148
    %v1160 = vpop.f32.mrf.mxu0
    %v1161 = vadd.f32 %v1096, %v1160
    %1162 = vmatmul.f32.gmra.mxu0 %v154
    %v1163 = vpop.f32.mrf.mxu0
    %v1164 = vadd.f32 %v1099, %v1163
    %1165 = vmatmul.f32.gmra.mxu0 %v160
    %v1166 = vpop.f32.mrf.mxu0
    %v1167 = vadd.f32 %v1102, %v1166
    %1168 = vmatmul.f32.gmra.mxu0 %v166
    %v1169 = vpop.f32.mrf.mxu0
    %v1170 = vadd.f32 %v1105, %v1169
    %1171 = vmatmul.f32.gmra.mxu0 %v172
    %v1172 = vpop.f32.mrf.mxu0
    %v1173 = vadd.f32 %v1108, %v1172
    %1174 = vmatmul.f32.gmra.mxu0 %v178
    %v1175 = vpop.f32.mrf.mxu0
    %v1176 = vadd.f32 %v1111, %v1175
    %1177 = vmatmul.f32.gmra.mxu0 %v184
    %v1178 = vpop.f32.mrf.mxu0
    %v1179 = vadd.f32 %v1114, %v1178
    %1180 = vmatmul.f32.gmra.mxu0 %v190
    %v1181 = vpop.f32.mrf.mxu0
    %v1182 = vadd.f32 %v1117, %v1181
    %1183 = vmatmul.f32.gmra.mxu0 %v196
    %v1184 = vpop.f32.mrf.mxu0
    %v1185 = vadd.f32 %v1120, %v1184
    %1186 = vmatmul.f32.gmra.mxu0 %v202
    %v1187 = vpop.f32.mrf.mxu0
    %v1188 = vadd.f32 %v1123, %v1187
    %1189 = vmatmul.f32.gmra.mxu0 %v208
    %v1190 = vpop.f32.mrf.mxu0
    %v1191 = vadd.f32 %v1126, %v1190
    %1192 = vmatmul.f32.gmra.mxu0 %v214
    %v1193 = vpop.f32.mrf.mxu0
    %v1194 = vadd.f32 %v1129, %v1193
    %1195 = vmatmul.f32.gmra.mxu0 %v220
    %v1196 = vpop.f32.mrf.mxu0
    %v1197 = vadd.f32 %v1132, %v1196
    %1198 = vdwg.mxu0
    %v1199 = vtanh.pop %v762
    %v1200 = vtanh.pop %v1152
    %v1201 = vtanh.pop %v765
    %v1202 = vtanh.pop %v1155
    %v1203 = vtanh.pop %v768
    %v1204 = vtanh.pop %v1158
    %v1205 = vtanh.pop %v771
    %v1206 = vtanh.pop %v1161
    %v1207 = vtanh.pop %v774
    %v1208 = vtanh.pop %v1164
    %v1209 = vtanh.pop %v777
    %v1210 = vtanh.pop %v1167
    %v1211 = vtanh.pop %v780
    %v1212 = vtanh.pop %v1170
    %v1213 = vtanh.pop %v783
    %v1214 = vtanh.pop %v1173
    %v1215 = vtanh.pop %v786
    %v1216 = vtanh.pop %v1176
    %v1217 = vtanh.pop %v789
    %v1218 = vtanh.pop %v1179
    %v1219 = vtanh.pop %v792
    %v1220 = vtanh.pop %v1182
    %v1221 = vtanh.pop %v795
    %v1222 = vtanh.pop %v1185
    %v1223 = vtanh.pop %v798
    %v1224 = vtanh.pop %v1188
    %v1225 = vtanh.pop %v801
    %v1226 = vtanh.pop %v1191
    %v1227 = vtanh.pop %v804
    %v1228 = vtanh.pop %v1194
    %v1229 = vtanh.pop %v807
    %v1230 = vtanh.pop %v1197
    %v1231 = vld [vmem:[#allocation8] sm:$0xff]
    %v1232 = vld [vmem:[#allocation8 + $0x8] sm:$0xff]
    %v1233 = vld [vmem:[#allocation8 + $0x10] sm:$0xff]
    %v1234 = vld [vmem:[#allocation8 + $0x18] sm:$0xff]
    %v1235 = vld [vmem:[#allocation8 + $0x20] sm:$0xff]
    %v1236 = vld [vmem:[#allocation8 + $0x28] sm:$0xff]
    %v1237 = vld [vmem:[#allocation8 + $0x30] sm:$0xff]
    %v1238 = vld [vmem:[#allocation8 + $0x38] sm:$0xff]
    %v1239 = vld [vmem:[#allocation8 + $0x40] sm:$0xff]
    %v1240 = vld [vmem:[#allocation8 + $0x48] sm:$0xff]
    %v1241 = vld [vmem:[#allocation8 + $0x50] sm:$0xff]
    %v1242 = vld [vmem:[#allocation8 + $0x58] sm:$0xff]
    %v1243 = vld [vmem:[#allocation8 + $0x60] sm:$0xff]
    %v1244 = vld [vmem:[#allocation8 + $0x68] sm:$0xff]
    %v1245 = vld [vmem:[#allocation8 + $0x70] sm:$0xff]
    %v1246 = vld [vmem:[#allocation8 + $0x78] sm:$0xff]
    %v1247 = vld [vmem:[#allocation8 + $0x80] sm:$0xff]
    %v1248 = vld [vmem:[#allocation8 + $0x88] sm:$0xff]
    %v1249 = vld [vmem:[#allocation8 + $0x90] sm:$0xff]
    %v1250 = vld [vmem:[#allocation8 + $0x98] sm:$0xff]
    %v1251 = vld [vmem:[#allocation8 + $0xa0] sm:$0xff]
    %v1252 = vld [vmem:[#allocation8 + $0xa8] sm:$0xff]
    %v1253 = vld [vmem:[#allocation8 + $0xb0] sm:$0xff]
    %v1254 = vld [vmem:[#allocation8 + $0xb8] sm:$0xff]
    %v1255 = vld [vmem:[#allocation8 + $0xc0] sm:$0xff]
    %v1256 = vld [vmem:[#allocation8 + $0xc8] sm:$0xff]
    %v1257 = vld [vmem:[#allocation8 + $0xd0] sm:$0xff]
    %v1258 = vld [vmem:[#allocation8 + $0xd8] sm:$0xff]
    %v1259 = vld [vmem:[#allocation8 + $0xe0] sm:$0xff]
    %v1260 = vld [vmem:[#allocation8 + $0xe8] sm:$0xff]
    %v1261 = vld [vmem:[#allocation8 + $0xf0] sm:$0xff]
    %v1262 = vld [vmem:[#allocation8 + $0xf8] sm:$0xff]
    %v1263 = vld [vmem:[%s4] sm:$0x1]
    %v1265 = vperm.slane %v1263, 0
    %1267 = vmatpush.msra.mxu0 %v1246
    %1268 = vmatpush.msra.mxu0 %v1245
    %1269 = vmatpush.msra.mxu0 %v1244
    %1270 = vmatpush.msra.mxu0 %v1243
    %1271 = vmatpush.msra.mxu0 %v1242
    %1272 = vmatpush.msra.mxu0 %v1241
    %1273 = vmatpush.msra.mxu0 %v1240
    %1274 = vmatpush.msra.mxu0 %v1239
    %1275 = vmatpush.msra.mxu0 %v1238
    %1276 = vmatpush.msra.mxu0 %v1237
    %1277 = vmatpush.msra.mxu0 %v1236
    %1278 = vmatpush.msra.mxu0 %v1235
    %1279 = vmatpush.msra.mxu0 %v1234
    %1280 = vmatpush.msra.mxu0 %v1233
    %1281 = vmatpush.msra.mxu0 %v1232
    %1282 = vmatpush.msra.mxu0 %v1231
    %1283 = vmatmul.f32.gmra.mxu0 %v1199
    %v1284 = vpop.f32.mrf.mxu0
    %v1285 = vadd.f32 %v1265, %v1284
    %1286 = vmatmul.f32.gmra.mxu0 %v1201
    %v1287 = vpop.f32.mrf.mxu0
    %v1288 = vadd.f32 %v1265, %v1287
    %1289 = vmatmul.f32.gmra.mxu0 %v1203
    %v1290 = vpop.f32.mrf.mxu0
    %v1291 = vadd.f32 %v1265, %v1290
    %1292 = vmatmul.f32.gmra.mxu0 %v1205
    %v1293 = vpop.f32.mrf.mxu0
    %v1294 = vadd.f32 %v1265, %v1293
    %1295 = vmatmul.f32.gmra.mxu0 %v1207
    %v1296 = vpop.f32.mrf.mxu0
    %v1297 = vadd.f32 %v1265, %v1296
    %1298 = vmatmul.f32.gmra.mxu0 %v1209
    %v1299 = vpop.f32.mrf.mxu0
    %v1300 = vadd.f32 %v1265, %v1299
    %1301 = vmatmul.f32.gmra.mxu0 %v1211
    %v1302 = vpop.f32.mrf.mxu0
    %v1303 = vadd.f32 %v1265, %v1302
    %1304 = vmatmul.f32.gmra.mxu0 %v1213
    %v1305 = vpop.f32.mrf.mxu0
    %v1306 = vadd.f32 %v1265, %v1305
    %1307 = vmatmul.f32.gmra.mxu0 %v1215
    %v1308 = vpop.f32.mrf.mxu0
    %v1309 = vadd.f32 %v1265, %v1308
    %1310 = vmatmul.f32.gmra.mxu0 %v1217
    %v1311 = vpop.f32.mrf.mxu0
    %v1312 = vadd.f32 %v1265, %v1311
    %1313 = vmatmul.f32.gmra.mxu0 %v1219
    %v1314 = vpop.f32.mrf.mxu0
    %v1315 = vadd.f32 %v1265, %v1314
    %1316 = vmatmul.f32.gmra.mxu0 %v1221
    %v1317 = vpop.f32.mrf.mxu0
    %v1318 = vadd.f32 %v1265, %v1317
    %1319 = vmatmul.f32.gmra.mxu0 %v1223
    %v1320 = vpop.f32.mrf.mxu0
    %v1321 = vadd.f32 %v1265, %v1320
    %1322 = vmatmul.f32.gmra.mxu0 %v1225
    %v1323 = vpop.f32.mrf.mxu0
    %v1324 = vadd.f32 %v1265, %v1323
    %1325 = vmatmul.f32.gmra.mxu0 %v1227
    %v1326 = vpop.f32.mrf.mxu0
    %v1327 = vadd.f32 %v1265, %v1326
    %1328 = vmatmul.f32.gmra.mxu0 %v1229
    %v1329 = vpop.f32.mrf.mxu0
    %v1330 = vadd.f32 %v1265, %v1329
    %1331 = vdwg.mxu0
    %1332 = vmatpush.msra.mxu0 %v1262
    %1333 = vmatpush.msra.mxu0 %v1261
    %1334 = vmatpush.msra.mxu0 %v1260
    %1335 = vmatpush.msra.mxu0 %v1259
    %1336 = vmatpush.msra.mxu0 %v1258
    %1337 = vmatpush.msra.mxu0 %v1257
    %1338 = vmatpush.msra.mxu0 %v1256
    %1339 = vmatpush.msra.mxu0 %v1255
    %1340 = vmatpush.msra.mxu0 %v1254
    %1341 = vmatpush.msra.mxu0 %v1253
    %1342 = vmatpush.msra.mxu0 %v1252
    %1343 = vmatpush.msra.mxu0 %v1251
    %1344 = vmatpush.msra.mxu0 %v1250
    %1345 = vmatpush.msra.mxu0 %v1249
    %1346 = vmatpush.msra.mxu0 %v1248
    %1347 = vmatpush.msra.mxu0 %v1247
    %1348 = vmatmul.f32.gmra.mxu0 %v1200
    %v1349 = vpop.f32.mrf.mxu0
    %v1350 = vadd.f32 %v1285, %v1349
    %1351 = vmatmul.f32.gmra.mxu0 %v1202
    %v1352 = vpop.f32.mrf.mxu0
    %v1353 = vadd.f32 %v1288, %v1352
    %1354 = vmatmul.f32.gmra.mxu0 %v1204
    %v1355 = vpop.f32.mrf.mxu0
    %v1356 = vadd.f32 %v1291, %v1355
    %1357 = vmatmul.f32.gmra.mxu0 %v1206
    %v1358 = vpop.f32.mrf.mxu0
    %v1359 = vadd.f32 %v1294, %v1358
    %1360 = vmatmul.f32.gmra.mxu0 %v1208
    %v1361 = vpop.f32.mrf.mxu0
    %v1362 = vadd.f32 %v1297, %v1361
    %1363 = vmatmul.f32.gmra.mxu0 %v1210
    %v1364 = vpop.f32.mrf.mxu0
    %v1365 = vadd.f32 %v1300, %v1364
    %1366 = vmatmul.f32.gmra.mxu0 %v1212
    %v1367 = vpop.f32.mrf.mxu0
    %v1368 = vadd.f32 %v1303, %v1367
    %1369 = vmatmul.f32.gmra.mxu0 %v1214
    %v1370 = vpop.f32.mrf.mxu0
    %v1371 = vadd.f32 %v1306, %v1370
    %1372 = vmatmul.f32.gmra.mxu0 %v1216
    %v1373 = vpop.f32.mrf.mxu0
    %v1374 = vadd.f32 %v1309, %v1373
    %1375 = vmatmul.f32.gmra.mxu0 %v1218
    %v1376 = vpop.f32.mrf.mxu0
    %v1377 = vadd.f32 %v1312, %v1376
    %1378 = vmatmul.f32.gmra.mxu0 %v1220
    %v1379 = vpop.f32.mrf.mxu0
    %v1380 = vadd.f32 %v1315, %v1379
    %1381 = vmatmul.f32.gmra.mxu0 %v1222
    %v1382 = vpop.f32.mrf.mxu0
    %v1383 = vadd.f32 %v1318, %v1382
    %1384 = vmatmul.f32.gmra.mxu0 %v1224
    %v1385 = vpop.f32.mrf.mxu0
    %v1386 = vadd.f32 %v1321, %v1385
    %1387 = vmatmul.f32.gmra.mxu0 %v1226
    %v1388 = vpop.f32.mrf.mxu0
    %v1389 = vadd.f32 %v1324, %v1388
    %1390 = vmatmul.f32.gmra.mxu0 %v1228
    %v1391 = vpop.f32.mrf.mxu0
    %v1392 = vadd.f32 %v1327, %v1391
    %1393 = vmatmul.f32.gmra.mxu0 %v1230
    %v1394 = vpop.f32.mrf.mxu0
    %v1395 = vadd.f32 %v1330, %v1394
    %1396 = vdwg.mxu0
    %v1397 = vtanh.pop %v1350
    %v1398 = vtanh.pop %v1353
    %v1399 = vtanh.pop %v1356
    %v1400 = vtanh.pop %v1359
    %v1401 = vtanh.pop %v1362
    %v1402 = vtanh.pop %v1365
    %v1403 = vtanh.pop %v1368
    %v1404 = vtanh.pop %v1371
    %v1405 = vtanh.pop %v1374
    %v1406 = vtanh.pop %v1377
    %v1407 = vtanh.pop %v1380
    %v1408 = vtanh.pop %v1383
    %v1409 = vtanh.pop %v1386
    %v1410 = vtanh.pop %v1389
    %v1411 = vtanh.pop %v1392
    %v1412 = vtanh.pop %v1395
    %v1413 = vld [vmem:[#allocation10] sm:$0xff]
    %v1414 = vld [vmem:[#allocation10 + $0x8] sm:$0xff]
    %v1415 = vld [vmem:[#allocation10 + $0x10] sm:$0xff]
    %v1416 = vld [vmem:[#allocation10 + $0x18] sm:$0xff]
    %v1417 = vld [vmem:[#allocation10 + $0x20] sm:$0xff]
    %v1418 = vld [vmem:[#allocation10 + $0x28] sm:$0xff]
    %v1419 = vld [vmem:[#allocation10 + $0x30] sm:$0xff]
    %v1420 = vld [vmem:[#allocation10 + $0x38] sm:$0xff]
    %v1421 = vld [vmem:[#allocation10 + $0x40] sm:$0xff]
    %v1422 = vld [vmem:[#allocation10 + $0x48] sm:$0xff]
    %v1423 = vld [vmem:[#allocation10 + $0x50] sm:$0xff]
    %v1424 = vld [vmem:[#allocation10 + $0x58] sm:$0xff]
    %v1425 = vld [vmem:[#allocation10 + $0x60] sm:$0xff]
    %v1426 = vld [vmem:[#allocation10 + $0x68] sm:$0xff]
    %v1427 = vld [vmem:[#allocation10 + $0x70] sm:$0xff]
    %v1428 = vld [vmem:[#allocation10 + $0x78] sm:$0xff]
    %v1429 = vld [vmem:[%s6] sm:$0x1]
    %v1431 = vperm.slane %v1429, 0
    %1433 = vmatpush.msra.mxu0 %v1428
    %1434 = vmatpush.msra.mxu0 %v1427
    %1435 = vmatpush.msra.mxu0 %v1426
    %1436 = vmatpush.msra.mxu0 %v1425
    %1437 = vmatpush.msra.mxu0 %v1424
    %1438 = vmatpush.msra.mxu0 %v1423
    %1439 = vmatpush.msra.mxu0 %v1422
    %1440 = vmatpush.msra.mxu0 %v1421
    %1441 = vmatpush.msra.mxu0 %v1420
    %1442 = vmatpush.msra.mxu0 %v1419
    %1443 = vmatpush.msra.mxu0 %v1418
    %1444 = vmatpush.msra.mxu0 %v1417
    %1445 = vmatpush.msra.mxu0 %v1416
    %1446 = vmatpush.msra.mxu0 %v1415
    %1447 = vmatpush.msra.mxu0 %v1414
    %1448 = vmatpush.msra.mxu0 %v1413
    %1449 = vmatmul.f32.gmra.mxu0 %v1397
    %v1450 = vpop.f32.mrf.mxu0
    %v1451 = vadd.f32 %v1431, %v1450
    %1452 = vmatmul.f32.gmra.mxu0 %v1398
    %v1453 = vpop.f32.mrf.mxu0
    %v1454 = vadd.f32 %v1431, %v1453
    %1455 = vmatmul.f32.gmra.mxu0 %v1399
    %v1456 = vpop.f32.mrf.mxu0
    %v1457 = vadd.f32 %v1431, %v1456
    %1458 = vmatmul.f32.gmra.mxu0 %v1400
    %v1459 = vpop.f32.mrf.mxu0
    %v1460 = vadd.f32 %v1431, %v1459
    %1461 = vmatmul.f32.gmra.mxu0 %v1401
    %v1462 = vpop.f32.mrf.mxu0
    %v1463 = vadd.f32 %v1431, %v1462
    %1464 = vmatmul.f32.gmra.mxu0 %v1402
    %v1465 = vpop.f32.mrf.mxu0
    %v1466 = vadd.f32 %v1431, %v1465
    %1467 = vmatmul.f32.gmra.mxu0 %v1403
    %v1468 = vpop.f32.mrf.mxu0
    %v1469 = vadd.f32 %v1431, %v1468
    %1470 = vmatmul.f32.gmra.mxu0 %v1404
    %v1471 = vpop.f32.mrf.mxu0
    %v1472 = vadd.f32 %v1431, %v1471
    %1473 = vmatmul.f32.gmra.mxu0 %v1405
    %v1474 = vpop.f32.mrf.mxu0
    %v1475 = vadd.f32 %v1431, %v1474
    %1476 = vmatmul.f32.gmra.mxu0 %v1406
    %v1477 = vpop.f32.mrf.mxu0
    %v1478 = vadd.f32 %v1431, %v1477
    %1479 = vmatmul.f32.gmra.mxu0 %v1407
    %v1480 = vpop.f32.mrf.mxu0
    %v1481 = vadd.f32 %v1431, %v1480
    %1482 = vmatmul.f32.gmra.mxu0 %v1408
    %v1483 = vpop.f32.mrf.mxu0
    %v1484 = vadd.f32 %v1431, %v1483
    %1485 = vmatmul.f32.gmra.mxu0 %v1409
    %v1486 = vpop.f32.mrf.mxu0
    %v1487 = vadd.f32 %v1431, %v1486
    %1488 = vmatmul.f32.gmra.mxu0 %v1410
    %v1489 = vpop.f32.mrf.mxu0
    %v1490 = vadd.f32 %v1431, %v1489
    %1491 = vmatmul.f32.gmra.mxu0 %v1411
    %v1492 = vpop.f32.mrf.mxu0
    %v1493 = vadd.f32 %v1431, %v1492
    %1494 = vmatmul.f32.gmra.mxu0 %v1412
    %v1495 = vpop.f32.mrf.mxu0
    %v1496 = vadd.f32 %v1431, %v1495
    %1497 = vdwg.mxu0
    %v1498 = vtanh.pop %v1451
    %v1499 = vtanh.pop %v1454
    %v1500 = vtanh.pop %v1457
    %v1501 = vtanh.pop %v1460
    %v1502 = vtanh.pop %v1463
    %v1503 = vtanh.pop %v1466
    %v1504 = vtanh.pop %v1469
    %v1505 = vtanh.pop %v1472
    %v1506 = vtanh.pop %v1475
    %v1507 = vtanh.pop %v1478
    %v1508 = vtanh.pop %v1481
    %v1509 = vtanh.pop %v1484
    %v1510 = vtanh.pop %v1487
    %v1511 = vtanh.pop %v1490
    %v1512 = vtanh.pop %v1493
    %v1513 = vtanh.pop %v1496
    %v1514 = vld [vmem:[#allocation11] sm:$0xff]
    %v1515 = vld [vmem:[#allocation11 + $0x8] sm:$0xff]
    %v1516 = vld [vmem:[#allocation11 + $0x10] sm:$0xff]
    %v1517 = vld [vmem:[#allocation11 + $0x18] sm:$0xff]
    %v1518 = vld [vmem:[#allocation11 + $0x20] sm:$0xff]
    %v1519 = vld [vmem:[#allocation11 + $0x28] sm:$0xff]
    %v1520 = vld [vmem:[#allocation11 + $0x30] sm:$0xff]
    %v1521 = vld [vmem:[#allocation11 + $0x38] sm:$0xff]
    %v1522 = vld [vmem:[#allocation11 + $0x40] sm:$0xff]
    %v1523 = vld [vmem:[#allocation11 + $0x48] sm:$0xff]
    %v1524 = vld [vmem:[#allocation11 + $0x50] sm:$0xff]
    %v1525 = vld [vmem:[#allocation11 + $0x58] sm:$0xff]
    %v1526 = vld [vmem:[#allocation11 + $0x60] sm:$0xff]
    %v1527 = vld [vmem:[#allocation11 + $0x68] sm:$0xff]
    %v1528 = vld [vmem:[#allocation11 + $0x70] sm:$0xff]
    %v1529 = vld [vmem:[#allocation11 + $0x78] sm:$0xff]
    %v1530 = vld [vmem:[%s8] sm:$0x1]
    %v1532 = vperm.slane %v1530, 0
    %1534 = vmatpush.msra.mxu0 %v1529
    %1535 = vmatpush.msra.mxu0 %v1528
    %1536 = vmatpush.msra.mxu0 %v1527
    %1537 = vmatpush.msra.mxu0 %v1526
    %1538 = vmatpush.msra.mxu0 %v1525
    %1539 = vmatpush.msra.mxu0 %v1524
    %1540 = vmatpush.msra.mxu0 %v1523
    %1541 = vmatpush.msra.mxu0 %v1522
    %1542 = vmatpush.msra.mxu0 %v1521
    %1543 = vmatpush.msra.mxu0 %v1520
    %1544 = vmatpush.msra.mxu0 %v1519
    %1545 = vmatpush.msra.mxu0 %v1518
    %1546 = vmatpush.msra.mxu0 %v1517
    %1547 = vmatpush.msra.mxu0 %v1516
    %1548 = vmatpush.msra.mxu0 %v1515
    %1549 = vmatpush.msra.mxu0 %v1514
    %1550 = vmatmul.f32.gmra.mxu0 %v1498
    %v1551 = vpop.f32.mrf.mxu0
    %v1552 = vadd.f32 %v1532, %v1551
    %1553 = vmatmul.f32.gmra.mxu0 %v1499
    %v1554 = vpop.f32.mrf.mxu0
    %v1555 = vadd.f32 %v1532, %v1554
    %1556 = vmatmul.f32.gmra.mxu0 %v1500
    %v1557 = vpop.f32.mrf.mxu0
    %v1558 = vadd.f32 %v1532, %v1557
    %1559 = vmatmul.f32.gmra.mxu0 %v1501
    %v1560 = vpop.f32.mrf.mxu0
    %v1561 = vadd.f32 %v1532, %v1560
    %1562 = vmatmul.f32.gmra.mxu0 %v1502
    %v1563 = vpop.f32.mrf.mxu0
    %v1564 = vadd.f32 %v1532, %v1563
    %1565 = vmatmul.f32.gmra.mxu0 %v1503
    %v1566 = vpop.f32.mrf.mxu0
    %v1567 = vadd.f32 %v1532, %v1566
    %1568 = vmatmul.f32.gmra.mxu0 %v1504
    %v1569 = vpop.f32.mrf.mxu0
    %v1570 = vadd.f32 %v1532, %v1569
    %1571 = vmatmul.f32.gmra.mxu0 %v1505
    %v1572 = vpop.f32.mrf.mxu0
    %v1573 = vadd.f32 %v1532, %v1572
    %1574 = vmatmul.f32.gmra.mxu0 %v1506
    %v1575 = vpop.f32.mrf.mxu0
    %v1576 = vadd.f32 %v1532, %v1575
    %1577 = vmatmul.f32.gmra.mxu0 %v1507
    %v1578 = vpop.f32.mrf.mxu0
    %v1579 = vadd.f32 %v1532, %v1578
    %1580 = vmatmul.f32.gmra.mxu0 %v1508
    %v1581 = vpop.f32.mrf.mxu0
    %v1582 = vadd.f32 %v1532, %v1581
    %1583 = vmatmul.f32.gmra.mxu0 %v1509
    %v1584 = vpop.f32.mrf.mxu0
    %v1585 = vadd.f32 %v1532, %v1584
    %1586 = vmatmul.f32.gmra.mxu0 %v1510
    %v1587 = vpop.f32.mrf.mxu0
    %v1588 = vadd.f32 %v1532, %v1587
    %1589 = vmatmul.f32.gmra.mxu0 %v1511
    %v1590 = vpop.f32.mrf.mxu0
    %v1591 = vadd.f32 %v1532, %v1590
    %1592 = vmatmul.f32.gmra.mxu0 %v1512
    %v1593 = vpop.f32.mrf.mxu0
    %v1594 = vadd.f32 %v1532, %v1593
    %1595 = vmatmul.f32.gmra.mxu0 %v1513
    %v1596 = vpop.f32.mrf.mxu0
    %v1597 = vadd.f32 %v1532, %v1596
    %1598 = vdwg.mxu0
    %1599 = vxpose.xlu0.b32.start [1/16] %v1552, 128
    %1600 = vxpose.xlu0.b32.cont [2/16] %v1555, 128
    %1601 = vxpose.xlu0.b32.cont [3/16] %v1558, 128
    %1602 = vxpose.xlu0.b32.cont [4/16] %v1561, 128
    %1603 = vxpose.xlu0.b32.cont [5/16] %v1564, 128
    %1604 = vxpose.xlu0.b32.cont [6/16] %v1567, 128
    %1605 = vxpose.xlu0.b32.cont [7/16] %v1570, 128
    %1606 = vxpose.xlu0.b32.cont [8/16] %v1573, 128
    %1607 = vxpose.xlu0.b32.cont [9/16] %v1576, 128
    %1608 = vxpose.xlu0.b32.cont [10/16] %v1579, 128
    %1609 = vxpose.xlu0.b32.cont [11/16] %v1582, 128
    %1610 = vxpose.xlu0.b32.cont [12/16] %v1585, 128
    %1611 = vxpose.xlu0.b32.cont [13/16] %v1588, 128
    %1612 = vxpose.xlu0.b32.cont [14/16] %v1591, 128
    %1613 = vxpose.xlu0.b32.cont [15/16] %v1594, 128
    %1614 = vxpose.xlu0.b32.end [16/16] %v1597, 128
    %v1615 = vpop.trf.xlu0
    %v1616 = vpop.trf.xlu0
    %v1617 = vpop.trf.xlu0
    %v1618 = vpop.trf.xlu0
    %v1619 = vpop.trf.xlu0
    %v1620 = vpop.trf.xlu0
    %v1621 = vpop.trf.xlu0
    %v1622 = vpop.trf.xlu0
    %v1623 = vpop.trf.xlu0
    %v1624 = vpop.trf.xlu0
    %v1625 = vpop.trf.xlu0
    %v1626 = vpop.trf.xlu0
    %v1627 = vpop.trf.xlu0
    %v1628 = vpop.trf.xlu0
    %v1629 = vpop.trf.xlu0
    %v1630 = vpop.trf.xlu0
    %1631 = vst [vmem:[#allocation13] sm:$0x1] %v1615
    // Predicated region
    $region62: #{tpu_custom_call.1} parent=1 // pred_check
      _
    $region63: #{tpu_custom_call.1} parent=1 // pred_check_branch
      %1633 = sbr.rel (0) target = $region65
    $region64: #{tpu_custom_call.1} parent=1 // pred_region
      %1635 = vsyncadd [#allocation4], 0
      %s1637 = sshll.u32 [#allocation13], 4
      %s1638 = int_to_ptr.vmem [resolvable:$true] %s1637
      %s1639 = sshll.u32 %s9, 4
      %s1640 = int_to_ptr.hbm [resolvable:$true] %s1639
      %1642 = dma.vmem_to_hbm [thread:$0]  %s1638, 16, %s1640, [#allocation4]
    $region65: #{tpu_custom_call.1} parent=1 // pred_fallthru
      _
    // Predicated region
    $region66: #{tpu_custom_call.1} parent=1 // pred_check
      _
    $region67: #{tpu_custom_call.1} parent=1 // pred_check_branch
      %1644 = sbr.rel (0) target = $region69
    $region68: #{tpu_custom_call.1} parent=1 // pred_region
      %1646 = dma.done [#allocation4], 16
    $region69: #{tpu_custom_call.1} parent=1 // pred_fallthru
      _
    %1647 = vsyncpa [#allocation3], 1
    %1648 = vsyncpa [#allocation6], 1
    %1649 = vsyncpa [#allocation9], 1
    %1650 = vsyncpa [#allocation12], 1
    %1651 = vsyncpa [#allocation4], 1

</llo_original>
